<compile_context>
chip_gen: v5e
topology: v5e:2x2
jax: 0.10.0
libtpu: 0.0.40
codegen_flags: <defaults>
</compile_context>

<pallas_src>
import functools
import numpy as np
import jax
import jax.numpy as jnp
from jax import lax
from jax.experimental import pallas as pl
from jax.experimental.pallas import tpu as pltpu

# Flip to jnp.bfloat16 on v6e/v7x for ~4x MXU rate (loosen test tolerance accordingly).
MXU_DTYPE = jnp.float32


# ----------------------------------------------------------------------------
# helpers
# ----------------------------------------------------------------------------
def _round_up(x, m):
    return ((x + m - 1) // m) * m


def _row_tile(n, max_tile=1024):
    """Largest multiple-of-8 row tile dividing n (falls back to whole n)."""
    if n % 8 != 0:
        return n
    t = min(max_tile, n)
    while n % t:
        t -= 8
    return t


# ----------------------------------------------------------------------------
# Kernel 1: fused char-conv (Toeplitz matmul) + maxpool + tanh + highway
# ----------------------------------------------------------------------------
def conv_highway(x2d, toe_w, conv_b, hw_w, hw_b, n_pos, Dp):
    """x2d: (N, W*E) — one word per row, chars flat along lanes.
    toe_w: (W*E, n_pos*Dp) Toeplitz conv weight (per-position 128-padded blocks).
    conv_b: (1, Dp); hw_w: (Dp, 2*Dp) = [nonlinear | gate]; hw_b: (1, 2*Dp).
    Returns (N, Dp) highway output, lanes D..Dp zero."""
    N, WE = x2d.shape
    Np = _round_up(N, 8)
    xp = jnp.pad(x2d, ((0, Np - N), (0, 0))) if Np != N else x2d
    tn = _row_tile(Np)

    def kernel(x_ref, tw_ref, cb_ref, hw_ref, hb_ref, o_ref):
        # One big MXU push: (tn, W*E) x (W*E, n_pos*Dp)
        scores = jnp.dot(x_ref[...].astype(MXU_DTYPE),
                         tw_ref[...].astype(MXU_DTYPE),
                         preferred_element_type=jnp.float32)
        # max-pool over positions: 128-aligned lane slices, pure VPU maxes
        acc = scores[:, 0:Dp]
        for t in range(1, n_pos):
            acc = jnp.maximum(acc, scores[:, t * Dp:(t + 1) * Dp])
        # bias + tanh ONCE (exact: tanh monotone, bias constant over positions)
        conv = jnp.tanh(acc + cb_ref[...])                        # (tn, Dp)
        # fused highway projection: one (Dp, 2Dp) matmul, split at 128 boundary
        hz = jnp.dot(conv.astype(MXU_DTYPE), hw_ref[...].astype(MXU_DTYPE),
                     preferred_element_type=jnp.float32) + hb_ref[...]
        nonl = jnp.maximum(hz[:, :Dp], 0.0)
        gate = jax.nn.sigmoid(hz[:, Dp:])
        o_ref[...] = gate * nonl + (1.0 - gate) * conv            # lane-dense store

    def _full(a):
        return pl.BlockSpec(a.shape, lambda i: (0,) * a.ndim)

    out = pl.pallas_call(
        kernel,
        out_shape=jax.ShapeDtypeStruct((Np, Dp), jnp.float32),
        grid=(Np // tn,),
        in_specs=[pl.BlockSpec((tn, WE), lambda i: (i, 0)),
                  _full(toe_w), _full(conv_b), _full(hw_w), _full(hw_b)],
        out_specs=pl.BlockSpec((tn, Dp), lambda i: (i, 0)),
        compiler_params=pltpu.CompilerParams(
            dimension_semantics=("parallel",),
            vmem_limit_bytes=32 * 1024 * 1024),
    )(xp, toe_w, conv_b, hw_w, hw_b)
    return out[:N] if Np != N else out


# ----------------------------------------------------------------------------
# Kernel 2: fused multi-layer LSTM (PyTorch gate order i, f, g, o), packed gates
# ----------------------------------------------------------------------------
def lstm_stack(x_tm, h0, c0, layers, seq_len, bp, hp):
    """x_tm: (S*Bp, Dp) time-major flat (row = t*Bp + b), padded rows/lanes zero.
    h0/c0: (L, Bp, Hp).  layers[l] = (wih4 (Din_p, 4Hp), whh4 (Hp, 4Hp), b4 (1, 4Hp)).
    Returns (y (S*Bp, Hp), h_n (L, Bp, Hp), c_n (L, Bp, Hp))."""
    S, Bp, Hp = seq_len, bp, hp
    L = len(layers)
    flat_w = [w for lp in layers for w in lp]

    def kernel(*refs):
        x_ref, h0_ref, c0_ref = refs[:3]
        w_refs = refs[3:3 + 3 * L]
        y_ref, hn_ref, cn_ref = refs[3 + 3 * L:3 + 3 * L + 3]
        xg_sc, y_sc = refs[-2:]         # VMEM: hoisted x-projection / inter-layer act

        for l in range(L):              # L is small & static
            wih_ref, whh_ref, b_ref = w_refs[3 * l:3 * l + 3]
            x_in = x_ref[...] if l == 0 else y_sc[...]
            # Hoisted input projection: ONE (S*Bp, Din) x (Din, 4Hp) matmul per layer,
            # bias folded in, staged in VMEM for aligned per-step slices.
            xg_sc[...] = (jnp.dot(x_in.astype(MXU_DTYPE),
                                  wih_ref[...].astype(MXU_DTYPE),
                                  preferred_element_type=jnp.float32)
                          + b_ref[...])
            out_ref = y_ref if l == L - 1 else y_sc   # last layer's input stays in VMEM

            def step(t, carry):
                h, c = carry
                r = pl.multiple_of(t * Bp, 8)          # sublane-aligned (Bp % 8 == 0)
                # Single recurrent MXU push per step: (Bp, Hp) x (Hp, 4Hp)
                g = xg_sc[pl.ds(r, Bp), :] + jnp.dot(
                    h.astype(MXU_DTYPE), whh_ref[...].astype(MXU_DTYPE),
                    preferred_element_type=jnp.float32)
                # gate slices at k*Hp: 128-aligned lanes -> free
                i_g = jax.nn.sigmoid(g[:, 0 * Hp:1 * Hp])
                f_g = jax.nn.sigmoid(g[:, 1 * Hp:2 * Hp])
                g_g = jnp.tanh(g[:, 2 * Hp:3 * Hp])
                o_g = jax.nn.sigmoid(g[:, 3 * Hp:4 * Hp])
                c = f_g * c + i_g * g_g
                h = o_g * jnp.tanh(c)
                out_ref[pl.ds(r, Bp), :] = h           # unmasked sublane-aligned store
                return (h, c)

            h, c = lax.fori_loop(0, S, step, (h0_ref[l], c0_ref[l]))
            hn_ref[l] = h
            cn_ref[l] = c

    return pl.pallas_call(
        kernel,
        out_shape=(jax.ShapeDtypeStruct((S * Bp, Hp), jnp.float32),
                   jax.ShapeDtypeStruct((L, Bp, Hp), jnp.float32),
                   jax.ShapeDtypeStruct((L, Bp, Hp), jnp.float32)),
        scratch_shapes=[pltpu.VMEM((S * Bp, 4 * Hp), jnp.float32),
                        pltpu.VMEM((S * Bp, Hp), jnp.float32)],
        compiler_params=pltpu.CompilerParams(
            vmem_limit_bytes=32 * 1024 * 1024),   # explicit budget (v7x: 64 MiB phys)
    )(x_tm, h0, c0, *flat_w)


# ----------------------------------------------------------------------------
# Kernel 3: tiled fc1 (rows x vocab grid, both axes parallel, vocab fastest)
# ----------------------------------------------------------------------------
def linear_tiled(x, w, b, max_tm=1024, max_tn=1024):
    """x: (M, K); w: (K, V); b: (1, V). Rows padded to 8, vocab padded to 128."""
    M, K = x.shape
    V = w.shape[1]
    Mp = _round_up(M, 8)
    Vp = _round_up(V, 128)
    tm = min(max_tm, Mp)                    # covers all rows when it fits:
    while Mp % tm:                          # weight streamed from HBM exactly once
        tm -= 8
    tn = min(max_tn, Vp)
    while Vp % tn:
        tn -= 128
    xp = jnp.pad(x, ((0, Mp - M), (0, 0))) if Mp != M else x
    wp = jnp.pad(w, ((0, 0), (0, Vp - V))) if Vp != V else w
    bp = jnp.pad(b, ((0, 0), (0, Vp - V))) if Vp != V else b

    def kernel(x_ref, w_ref, b_ref, o_ref):
        o_ref[...] = (jnp.dot(x_ref[...].astype(MXU_DTYPE),
                              w_ref[...].astype(MXU_DTYPE),
                              preferred_element_type=jnp.float32) + b_ref[...])

    out = pl.pallas_call(
        kernel,
        out_shape=jax.ShapeDtypeStruct((Mp, Vp), jnp.float32),
        grid=(Mp // tm, Vp // tn),          # vocab (j) is the fastest grid axis
        in_specs=[pl.BlockSpec((tm, K), lambda i, j: (i, 0)),
                  pl.BlockSpec((K, tn), lambda i, j: (0, j)),
                  pl.BlockSpec((1, tn), lambda i, j: (0, j))],
        out_specs=pl.BlockSpec((tm, tn), lambda i, j: (i, j)),
        compiler_params=pltpu.CompilerParams(
            dimension_semantics=("parallel", "parallel"),
            vmem_limit_bytes=32 * 1024 * 1024),
    )(xp, wp, bp)
    return out[:M, :V]


# ----------------------------------------------------------------------------
# Parameter init (torch-semantics layouts) + packing into kernel layouts
# ----------------------------------------------------------------------------
def init_params(key, cfg):
    E = cfg["char_embed_dim"]
    H = cfg["hidden_dim"]
    D = int(np.sum(cfg["char_conv_fn"]))
    L = cfg["layer_num"]
    ks = iter(jax.random.split(key, 64))

    def u(shape, scale=0.1):
        return jax.random.uniform(next(ks), shape, jnp.float32, -scale, scale)

    params = {}
    # nn.Embedding(char_vocab_size, E, padding_idx=1) -> row 1 zeroed
    emb = u((cfg["char_vocab_size"], E), 0.1)
    params["char_embed"] = emb.at[1].set(0.0)

    # Conv1d(E, C_i, fw_i): torch weight (C, E, fw) -> matmul form (fw*E, C)
    conv_w, conv_b = [], []
    for C, fw in zip(cfg["char_conv_fn"], cfg["char_conv_fw"]):
        wt = u((C, E, fw), 0.2)
        conv_w.append(jnp.transpose(wt, (2, 1, 0)).reshape(fw * E, C))
        conv_b.append(u((1, C), 0.2))
    params["conv_w"], params["conv_b"] = conv_w, conv_b

    # Highway linears (stored (in, out)); gate bias ~ U(-2.05, 2.05) as in init_weights
    params["hw_nonl_w"] = u((D, D))
    params["hw_nonl_b"] = u((1, D))
    params["hw_gate_w"] = u((D, D))
    params["hw_gate_b"] = jax.random.uniform(next(ks), (1, D), jnp.float32, -2.05, 2.05)

    # LSTM (torch layout): W_ih (4H, Din), W_hh (4H, H), combined bias b_ih + b_hh
    lstm = []
    for l in range(L):
        din = D if l == 0 else H
        lstm.append((u((4 * H, din)), u((4 * H, H)), u((4 * H,)) + u((4 * H,))))
    params["lstm"] = lstm

    # fc1: torch (V, H) -> stored (H, V)
    V = cfg["word_vocab_size"]
    params["fc1_w"] = u((H, V))
    params["fc1_b"] = u((1, V))
    return params


def pack_params(params, cfg):
    """Repack torch-layout weights into the MXU-friendly kernel layouts."""
    E = cfg["char_embed_dim"]
    W = cfg["max_wordlen"]
    H = cfg["hidden_dim"]
    fws = list(cfg["char_conv_fw"])
    fns = list(cfg["char_conv_fn"])
    D = int(np.sum(fns))
    Dp = _round_up(D, 128)
    Hp = _round_up(H, 128)
    n_pos = max(W - fw + 1 for fw in fws)
    L = cfg["layer_num"]
    offs = np.concatenate([[0], np.cumsum(fns)]).astype(int)

    # Toeplitz conv weight (W*E, n_pos*Dp): position-t column block holds every filter
    # placed at char offset t (narrower filters duplicate their last valid position —
    # exact under the subsequent max-pool).  Lanes D..Dp of each block stay zero.
    toe = jnp.zeros((W * E, n_pos * Dp), jnp.float32)
    for i, (fw, C) in enumerate(zip(fws, fns)):
        T_i = W - fw + 1
        wi = params["conv_w"][i]                                   # (fw*E, C)
        for t in range(n_pos):
            ts = min(t, T_i - 1)
            toe = toe.at[ts * E:(ts + fw) * E,
                         t * Dp + offs[i]:t * Dp + offs[i] + C].set(wi)
    conv_b = jnp.zeros((1, Dp), jnp.float32).at[:, :D].set(
        jnp.concatenate(params["conv_b"], axis=1))

    # Fused highway weight (Dp, 2*Dp): [:, :Dp]=nonlinear, [:, Dp:]=gate (padded lanes 0)
    hw_w = jnp.zeros((Dp, 2 * Dp), jnp.float32)
    hw_w = hw_w.at[:D, :D].set(params["hw_nonl_w"])
    hw_w = hw_w.at[:D, Dp:Dp + D].set(params["hw_gate_w"])
    hw_b = jnp.zeros((1, 2 * Dp), jnp.float32)
    hw_b = hw_b.at[:, :D].set(params["hw_nonl_b"])
    hw_b = hw_b.at[:, Dp:Dp + D].set(params["hw_gate_b"])

    # LSTM: gates packed into (Din_p, 4Hp)/(Hp, 4Hp)/(1, 4Hp); gate blocks start at
    # multiples of Hp (128-aligned), gate order i,f,g,o preserved; pads are zero.
    lstm = []
    for l in range(L):
        w_ih, w_hh, b = params["lstm"][l]
        din = D if l == 0 else H
        dinp = Dp if l == 0 else Hp
        wih4 = jnp.zeros((dinp, 4 * Hp), jnp.float32)
        whh4 = jnp.zeros((Hp, 4 * Hp), jnp.float32)
        b4 = jnp.zeros((1, 4 * Hp), jnp.float32)
        for k in range(4):
            wih4 = wih4.at[:din, k * Hp:k * Hp + H].set(w_ih[k * H:(k + 1) * H, :].T)
            whh4 = whh4.at[:H, k * Hp:k * Hp + H].set(w_hh[k * H:(k + 1) * H, :].T)
            b4 = b4.at[:, k * Hp:k * Hp + H].set(b[k * H:(k + 1) * H][None, :])
        lstm.append((wih4, whh4, b4))

    return dict(char_embed=params["char_embed"], toe_w=toe, conv_b=conv_b,
                hw_w=hw_w, hw_b=hw_b, lstm=lstm,
                fc1_w=params["fc1_w"], fc1_b=params["fc1_b"])


def init_hidden(cfg, batch_size):
    H, L = cfg["hidden_dim"], cfg["layer_num"]
    return (jnp.zeros((L, batch_size, H), jnp.float32),
            jnp.zeros((L, batch_size, H), jnp.float32))


# ----------------------------------------------------------------------------
# Forward pass (mirrors Char_NLM.forward)
# ----------------------------------------------------------------------------
def char_nlm_forward(packed, inputs, hidden, cfg):
    B, S, W = inputs.shape
    N = B * S
    E = cfg["char_embed_dim"]
    H = cfg["hidden_dim"]
    D = int(np.sum(cfg["char_conv_fn"]))
    Dp = _round_up(D, 128)
    Hp = _round_up(H, 128)
    Bp = _round_up(B, 8)
    n_pos = max(W - fw + 1 for fw in cfg["char_conv_fw"])

    # char embedding gather stays in XLA glue
    embeds = jnp.take(packed["char_embed"], inputs.reshape(N, W), axis=0)   # (N, W, E)
    x2d = embeds.reshape(N, W * E)          # chars along lanes

    # fused conv (Toeplitz matmul) + maxpool + tanh + highway, padded (N, Dp) output
    high = conv_highway(x2d, packed["toe_w"], packed["conv_b"],
                        packed["hw_w"], packed["hw_b"], n_pos, Dp)

    # time-major, batch padded to a multiple of 8
    x_tm = jnp.transpose(high.reshape(B, S, Dp), (1, 0, 2))                 # (S, B, Dp)
    if Bp != B:
        x_tm = jnp.pad(x_tm, ((0, 0), (0, Bp - B), (0, 0)))
    x_tm = x_tm.reshape(S * Bp, Dp)

    h0, c0 = hidden
    pad_bh = ((0, 0), (0, Bp - B), (0, Hp - H))
    y, hn, cn = lstm_stack(x_tm, jnp.pad(h0, pad_bh), jnp.pad(c0, pad_bh),
                           packed["lstm"], S, Bp, Hp)
    lstm_out = jnp.transpose(y.reshape(S, Bp, Hp)[:, :B, :H], (1, 0, 2)).reshape(N, H)
    # TODO(synk): nn.LSTM inter-layer dropout (rnn_dr) is training-only; not applied here.

    outputs = linear_tiled(lstm_out, packed["fc1_w"], packed["fc1_b"])
    return outputs, (hn[:, :B, :H], cn[:, :B, :H])


# ----------------------------------------------------------------------------
# Pure-JAX reference of the same forward pass (numerical validation)
# ----------------------------------------------------------------------------
def reference_forward(params, inputs, hidden, cfg):
    B, S, W = inputs.shape
    N = B * S
    E = cfg["char_embed_dim"]
    H = cfg["hidden_dim"]
    emb = params["char_embed"][inputs.reshape(N, W)]                        # (N, W, E)
    outs = []
    for i, (C, fw) in enumerate(zip(cfg["char_conv_fn"], cfg["char_conv_fw"])):
        wm, b = params["conv_w"][i], params["conv_b"][i]
        vals = [jnp.tanh(emb[:, t:t + fw, :].reshape(N, fw * E) @ wm + b)
                for t in range(W - fw + 1)]
        outs.append(jnp.max(jnp.stack(vals, 0), axis=0))
    conv = jnp.concatenate(outs, axis=1)                                    # (N, D)
    nonl = jax.nn.relu(conv @ params["hw_nonl_w"] + params["hw_nonl_b"])
    gate = jax.nn.sigmoid(conv @ params["hw_gate_w"] + params["hw_gate_b"])
    layer_in = (gate * nonl + (1.0 - gate) * conv).reshape(B, S, -1)

    h0, c0 = hidden
    hs, cs = [], []
    for l, (w_ih, w_hh, b) in enumerate(params["lstm"]):
        h, c = h0[l], c0[l]
        ys = []
        for t in range(S):
            xt = layer_in[:, t, :]
            g = xt @ w_ih.T + h @ w_hh.T + b
            i_g = jax.nn.sigmoid(g[:, 0 * H:1 * H])
            f_g = jax.nn.sigmoid(g[:, 1 * H:2 * H])
            g_g = jnp.tanh(g[:, 2 * H:3 * H])
            o_g = jax.nn.sigmoid(g[:, 3 * H:4 * H])
            c = f_g * c + i_g * g_g
            h = o_g * jnp.tanh(c)
            ys.append(h)
        layer_in = jnp.stack(ys, axis=1)                                    # (B, S, H)
        hs.append(h)
        cs.append(c)
    out = layer_in.reshape(N, H) @ params["fc1_w"] + params["fc1_b"]
    return out, (jnp.stack(hs, 0), jnp.stack(cs, 0))


# ----------------------------------------------------------------------------
if __name__ == "__main__":
    cfg = dict(
        char_vocab_size=50,
        char_embed_dim=16,
        char_conv_fn=[8, 16, 24],
        char_conv_fw=[2, 3, 4],
        max_wordlen=10,
        hidden_dim=32,
        layer_num=2,
        word_vocab_size=100,
        batch_size=2,
        seq_len=8,
        rnn_dr=0.0,
    )

    key = jax.random.PRNGKey(0)
    k_param, k_inp = jax.random.split(key)
    params = init_params(k_param, cfg)
    packed = pack_params(params, cfg)

    inputs = jax.random.randint(
        k_inp, (cfg["batch_size"], cfg["seq_len"], cfg["max_wordlen"]),
        0, cfg["char_vocab_size"], dtype=jnp.int32)
    hidden = init_hidden(cfg, cfg["batch_size"])

    fwd = jax.jit(functools.partial(char_nlm_forward, cfg=cfg))
    outputs, (h_n, c_n) = fwd(packed, inputs, hidden)
    jax.block_until_ready((outputs, h_n, c_n))

    assert outputs.shape == (cfg["batch_size"] * cfg["seq_len"], cfg["word_vocab_size"])
    assert h_n.shape == (cfg["layer_num"], cfg["batch_size"], cfg["hidden_dim"])
    assert c_n.shape == (cfg["layer_num"], cfg["batch_size"], cfg["hidden_dim"])

    # validate against a pure-JAX/XLA reference of the same math
    ref_out, (ref_h, ref_c) = reference_forward(params, inputs, hidden, cfg)
    np.testing.assert_allclose(np.asarray(outputs), np.asarray(ref_out), rtol=2e-3, atol=2e-3)
    np.testing.assert_allclose(np.asarray(h_n), np.asarray(ref_h), rtol=2e-3, atol=2e-3)
    np.testing.assert_allclose(np.asarray(c_n), np.asarray(ref_c), rtol=2e-3, atol=2e-3)

    print("KERNEL_OK")
</pallas_src>

<mosaic_0001>
module attributes {stable_mosaic.version = 11 : i64} {
  func.func @kernel(%arg0: i32, %arg1: memref<16x160xf32, #tpu.memory_space<vmem>>, %arg2: memref<160x1152xf32, #tpu.memory_space<vmem>>, %arg3: memref<1x128xf32, #tpu.memory_space<vmem>>, %arg4: memref<128x256xf32, #tpu.memory_space<vmem>>, %arg5: memref<1x256xf32, #tpu.memory_space<vmem>>, %arg6: memref<16x128xf32, #tpu.memory_space<vmem>>) attributes {dimension_semantics = [#tpu.dimension_semantics<parallel>], iteration_bounds = array<i64: 1>, scalar_prefetch = 0 : i64, scratch_operands = 0 : i64, tpu.core_type = #tpu.core_type<tc>, window_params = [{transform_indices = @transform_0, window_bounds = array<i64: 16, 160>}, {pipeline_mode = #tpu.pipeline_mode<synchronous>, transform_indices = @transform_1, window_bounds = array<i64: 160, 1152>}, {pipeline_mode = #tpu.pipeline_mode<synchronous>, transform_indices = @transform_2, window_bounds = array<i64: 1, 128>}, {pipeline_mode = #tpu.pipeline_mode<synchronous>, transform_indices = @transform_3, window_bounds = array<i64: 128, 256>}, {pipeline_mode = #tpu.pipeline_mode<synchronous>, transform_indices = @transform_4, window_bounds = array<i64: 1, 256>}, {transform_indices = @transform_5, window_bounds = array<i64: 16, 128>}]} {
    %c0 = arith.constant 0 : index
    %c0_0 = arith.constant 0 : index
    %0 = vector.load %arg1[%c0, %c0_0] : memref<16x160xf32, #tpu.memory_space<vmem>>, vector<16x160xf32>
    %c0_1 = arith.constant 0 : index
    %c0_2 = arith.constant 0 : index
    %1 = vector.load %arg2[%c0_1, %c0_2] : memref<160x1152xf32, #tpu.memory_space<vmem>>, vector<160x1152xf32>
    %cst = arith.constant dense<0.000000e+00> : vector<16x1152xf32>
    %2 = tpu.matmul %0, %1, %cst {dimension_numbers = #tpu.dot_dimension_numbers<[1], [0], [0], [1], [0, 0, 1, 1], [], []>} : vector<16x160xf32>, vector<160x1152xf32>, vector<16x1152xf32> -> vector<16x1152xf32>
    %3 = vector.extract_strided_slice %2 {offsets = [0, 0], sizes = [16, 128], strides = [1, 1]} : vector<16x1152xf32> to vector<16x128xf32>
    %4 = vector.extract_strided_slice %2 {offsets = [0, 128], sizes = [16, 128], strides = [1, 1]} : vector<16x1152xf32> to vector<16x128xf32>
    %5 = arith.maximumf %3, %4 : vector<16x128xf32>
    %6 = vector.extract_strided_slice %2 {offsets = [0, 256], sizes = [16, 128], strides = [1, 1]} : vector<16x1152xf32> to vector<16x128xf32>
    %7 = arith.maximumf %5, %6 : vector<16x128xf32>
    %8 = vector.extract_strided_slice %2 {offsets = [0, 384], sizes = [16, 128], strides = [1, 1]} : vector<16x1152xf32> to vector<16x128xf32>
    %9 = arith.maximumf %7, %8 : vector<16x128xf32>
    %10 = vector.extract_strided_slice %2 {offsets = [0, 512], sizes = [16, 128], strides = [1, 1]} : vector<16x1152xf32> to vector<16x128xf32>
    %11 = arith.maximumf %9, %10 : vector<16x128xf32>
    %12 = vector.extract_strided_slice %2 {offsets = [0, 640], sizes = [16, 128], strides = [1, 1]} : vector<16x1152xf32> to vector<16x128xf32>
    %13 = arith.maximumf %11, %12 : vector<16x128xf32>
    %14 = vector.extract_strided_slice %2 {offsets = [0, 768], sizes = [16, 128], strides = [1, 1]} : vector<16x1152xf32> to vector<16x128xf32>
    %15 = arith.maximumf %13, %14 : vector<16x128xf32>
    %16 = vector.extract_strided_slice %2 {offsets = [0, 896], sizes = [16, 128], strides = [1, 1]} : vector<16x1152xf32> to vector<16x128xf32>
    %17 = arith.maximumf %15, %16 : vector<16x128xf32>
    %18 = vector.extract_strided_slice %2 {offsets = [0, 1024], sizes = [16, 128], strides = [1, 1]} : vector<16x1152xf32> to vector<16x128xf32>
    %19 = arith.maximumf %17, %18 : vector<16x128xf32>
    %c0_3 = arith.constant 0 : index
    %c0_4 = arith.constant 0 : index
    %20 = vector.load %arg3[%c0_3, %c0_4] : memref<1x128xf32, #tpu.memory_space<vmem>>, vector<1x128xf32>
    %21 = vector.broadcast %20 : vector<1x128xf32> to vector<16x128xf32>
    %22 = arith.addf %19, %21 : vector<16x128xf32>
    %23 = math.tanh %22 : vector<16x128xf32>
    %c0_5 = arith.constant 0 : index
    %c0_6 = arith.constant 0 : index
    %24 = vector.load %arg4[%c0_5, %c0_6] : memref<128x256xf32, #tpu.memory_space<vmem>>, vector<128x256xf32>
    %cst_7 = arith.constant dense<0.000000e+00> : vector<16x256xf32>
    %25 = tpu.matmul %23, %24, %cst_7 {dimension_numbers = #tpu.dot_dimension_numbers<[1], [0], [0], [1], [0, 0, 1, 1], [], []>} : vector<16x128xf32>, vector<128x256xf32>, vector<16x256xf32> -> vector<16x256xf32>
    %c0_8 = arith.constant 0 : index
    %c0_9 = arith.constant 0 : index
    %26 = vector.load %arg5[%c0_8, %c0_9] : memref<1x256xf32, #tpu.memory_space<vmem>>, vector<1x256xf32>
    %27 = vector.broadcast %26 : vector<1x256xf32> to vector<16x256xf32>
    %28 = arith.addf %25, %27 : vector<16x256xf32>
    %29 = vector.extract_strided_slice %28 {offsets = [0, 0], sizes = [16, 128], strides = [1, 1]} : vector<16x256xf32> to vector<16x128xf32>
    %cst_10 = arith.constant 0.000000e+00 : f32
    %30 = vector.broadcast %cst_10 : f32 to vector<16x128xf32>
    %31 = arith.maximumf %29, %30 : vector<16x128xf32>
    %32 = vector.extract_strided_slice %28 {offsets = [0, 128], sizes = [16, 128], strides = [1, 1]} : vector<16x256xf32> to vector<16x128xf32>
    %33 = arith.negf %32 : vector<16x128xf32>
    %34 = math.exp %33 : vector<16x128xf32>
    %cst_11 = arith.constant 1.000000e+00 : f32
    %35 = vector.broadcast %cst_11 : f32 to vector<16x128xf32>
    %36 = arith.addf %35, %34 : vector<16x128xf32>
    %37 = arith.divf %35, %36 : vector<16x128xf32>
    %38 = arith.mulf %37, %31 : vector<16x128xf32>
    %cst_12 = arith.constant 1.000000e+00 : f32
    %39 = vector.broadcast %cst_12 : f32 to vector<16x128xf32>
    %40 = arith.subf %39, %37 : vector<16x128xf32>
    %41 = arith.mulf %40, %23 : vector<16x128xf32>
    %42 = arith.addf %38, %41 : vector<16x128xf32>
    %c0_13 = arith.constant 0 : index
    %c0_14 = arith.constant 0 : index
    %43 = vector.load %arg6[%c0_13, %c0_14] : memref<16x128xf32, #tpu.memory_space<vmem>>, vector<16x128xf32>
    tpu.vector_store %arg6[%c0_13, %c0_14], %42 {strides = array<i32>} : memref<16x128xf32, #tpu.memory_space<vmem>>, vector<16x128xf32>,
    return
  }
  func.func @transform_0(%arg0: i32) -> (i32, i32) {
    %c0_i32 = arith.constant 0 : i32
    %c0_i32_0 = arith.constant 0 : i32
    return %arg0, %c0_i32 : i32, i32
  }
  func.func @transform_1(%arg0: i32) -> (i32, i32) {
    %c0_i32 = arith.constant 0 : i32
    %c0_i32_0 = arith.constant 0 : i32
    %c0_i32_1 = arith.constant 0 : i32
    return %c0_i32, %c0_i32_0 : i32, i32
  }
  func.func @transform_2(%arg0: i32) -> (i32, i32) {
    %c0_i32 = arith.constant 0 : i32
    %c0_i32_0 = arith.constant 0 : i32
    %c0_i32_1 = arith.constant 0 : i32
    return %c0_i32, %c0_i32_0 : i32, i32
  }
  func.func @transform_3(%arg0: i32) -> (i32, i32) {
    %c0_i32 = arith.constant 0 : i32
    %c0_i32_0 = arith.constant 0 : i32
    %c0_i32_1 = arith.constant 0 : i32
    return %c0_i32, %c0_i32_0 : i32, i32
  }
  func.func @transform_4(%arg0: i32) -> (i32, i32) {
    %c0_i32 = arith.constant 0 : i32
    %c0_i32_0 = arith.constant 0 : i32
    %c0_i32_1 = arith.constant 0 : i32
    return %c0_i32, %c0_i32_0 : i32, i32
  }
  func.func @transform_5(%arg0: i32) -> (i32, i32) {
    %c0_i32 = arith.constant 0 : i32
    %c0_i32_0 = arith.constant 0 : i32
    return %arg0, %c0_i32 : i32, i32
  }
}

module attributes {stable_mosaic.version = 11 : i64} {
  func.func @kernel(%arg0: memref<64x128xf32, #tpu.memory_space<vmem>>, %arg1: memref<2x8x128xf32, #tpu.memory_space<vmem>>, %arg2: memref<2x8x128xf32, #tpu.memory_space<vmem>>, %arg3: memref<128x512xf32, #tpu.memory_space<vmem>>, %arg4: memref<128x512xf32, #tpu.memory_space<vmem>>, %arg5: memref<1x512xf32, #tpu.memory_space<vmem>>, %arg6: memref<128x512xf32, #tpu.memory_space<vmem>>, %arg7: memref<128x512xf32, #tpu.memory_space<vmem>>, %arg8: memref<1x512xf32, #tpu.memory_space<vmem>>, %arg9: memref<64x128xf32, #tpu.memory_space<vmem>>, %arg10: memref<2x8x128xf32, #tpu.memory_space<vmem>>, %arg11: memref<2x8x128xf32, #tpu.memory_space<vmem>>, %arg12: memref<64x512xf32, #tpu.memory_space<vmem>>, %arg13: memref<64x128xf32, #tpu.memory_space<vmem>>) attributes {dimension_semantics = [], scalar_prefetch = 0 : i64, scratch_operands = 2 : i64, tpu.core_type = #tpu.core_type<tc>} {
    %c0 = arith.constant 0 : index
    %c0_0 = arith.constant 0 : index
    %0 = vector.load %arg0[%c0, %c0_0] : memref<64x128xf32, #tpu.memory_space<vmem>>, vector<64x128xf32>
    %c0_1 = arith.constant 0 : index
    %c0_2 = arith.constant 0 : index
    %1 = vector.load %arg3[%c0_1, %c0_2] : memref<128x512xf32, #tpu.memory_space<vmem>>, vector<128x512xf32>
    %cst = arith.constant dense<0.000000e+00> : vector<64x512xf32>
    %2 = tpu.matmul %0, %1, %cst {dimension_numbers = #tpu.dot_dimension_numbers<[1], [0], [0], [1], [0, 0, 1, 1], [], []>} : vector<64x128xf32>, vector<128x512xf32>, vector<64x512xf32> -> vector<64x512xf32>
    %c0_3 = arith.constant 0 : index
    %c0_4 = arith.constant 0 : index
    %3 = vector.load %arg5[%c0_3, %c0_4] : memref<1x512xf32, #tpu.memory_space<vmem>>, vector<1x512xf32>
    %4 = vector.broadcast %3 : vector<1x512xf32> to vector<64x512xf32>
    %5 = arith.addf %2, %4 : vector<64x512xf32>
    %c0_5 = arith.constant 0 : index
    %c0_6 = arith.constant 0 : index
    %6 = vector.load %arg12[%c0_5, %c0_6] : memref<64x512xf32, #tpu.memory_space<vmem>>, vector<64x512xf32>
    tpu.vector_store %arg12[%c0_5, %c0_6], %5 {strides = array<i32>} : memref<64x512xf32, #tpu.memory_space<vmem>>, vector<64x512xf32>,
    %c0_7 = arith.constant 0 : index
    %c0_8 = arith.constant 0 : index
    %c0_9 = arith.constant 0 : index
    %7 = vector.load %arg1[%c0_7, %c0_8, %c0_9] : memref<2x8x128xf32, #tpu.memory_space<vmem>>, vector<1x8x128xf32>
    %8 = vector.shape_cast %7 : vector<1x8x128xf32> to vector<8x128xf32>
    %c0_10 = arith.constant 0 : index
    %c0_11 = arith.constant 0 : index
    %c0_12 = arith.constant 0 : index
    %9 = vector.load %arg2[%c0_10, %c0_11, %c0_12] : memref<2x8x128xf32, #tpu.memory_space<vmem>>, vector<1x8x128xf32>
    %10 = vector.shape_cast %9 : vector<1x8x128xf32> to vector<8x128xf32>
    %c0_i32 = arith.constant 0 : i32
    %c8_i32 = arith.constant 8 : i32
    %11 = arith.addi %c0_i32, %c8_i32 : i32
    %c1_i32 = arith.constant 1 : i32
    %12:2 = scf.for %arg14 = %c0_i32 to %11 step %c1_i32 iter_args(%arg15 = %8, %arg16 = %10) -> (vector<8x128xf32>, vector<8x128xf32>)  : i32 {
      %c8_i32_44 = arith.constant 8 : i32
      %38 = arith.muli %arg14, %c8_i32_44 : i32
      %39 = tpu.assume_multiple %38, 8 : i32
      %40 = arith.index_cast %39 : i32 to index
      %c0_45 = arith.constant 0 : index
      %41 = vector.load %arg12[%40, %c0_45] : memref<64x512xf32, #tpu.memory_space<vmem>>, vector<8x512xf32>
      %c0_46 = arith.constant 0 : index
      %c0_47 = arith.constant 0 : index
      %42 = vector.load %arg4[%c0_46, %c0_47] : memref<128x512xf32, #tpu.memory_space<vmem>>, vector<128x512xf32>
      %cst_48 = arith.constant dense<0.000000e+00> : vector<8x512xf32>
      %43 = tpu.matmul %arg15, %42, %cst_48 {dimension_numbers = #tpu.dot_dimension_numbers<[1], [0], [0], [1], [0, 0, 1, 1], [], []>} : vector<8x128xf32>, vector<128x512xf32>, vector<8x512xf32> -> vector<8x512xf32>
      %44 = arith.addf %41, %43 : vector<8x512xf32>
      %45 = vector.extract_strided_slice %44 {offsets = [0, 0], sizes = [8, 128], strides = [1, 1]} : vector<8x512xf32> to vector<8x128xf32>
      %46 = arith.negf %45 : vector<8x128xf32>
      %47 = math.exp %46 : vector<8x128xf32>
      %cst_49 = arith.constant 1.000000e+00 : f32
      %48 = vector.broadcast %cst_49 : f32 to vector<8x128xf32>
      %49 = arith.addf %48, %47 : vector<8x128xf32>
      %50 = arith.divf %48, %49 : vector<8x128xf32>
      %51 = vector.extract_strided_slice %44 {offsets = [0, 128], sizes = [8, 128], strides = [1, 1]} : vector<8x512xf32> to vector<8x128xf32>
      %52 = arith.negf %51 : vector<8x128xf32>
      %53 = math.exp %52 : vector<8x128xf32>
      %cst_50 = arith.constant 1.000000e+00 : f32
      %54 = vector.broadcast %cst_50 : f32 to vector<8x128xf32>
      %55 = arith.addf %54, %53 : vector<8x128xf32>
      %56 = arith.divf %54, %55 : vector<8x128xf32>
      %57 = vector.extract_strided_slice %44 {offsets = [0, 256], sizes = [8, 128], strides = [1, 1]} : vector<8x512xf32> to vector<8x128xf32>
      %58 = math.tanh %57 : vector<8x128xf32>
      %59 = vector.extract_strided_slice %44 {offsets = [0, 384], sizes = [8, 128], strides = [1, 1]} : vector<8x512xf32> to vector<8x128xf32>
      %60 = arith.negf %59 : vector<8x128xf32>
      %61 = math.exp %60 : vector<8x128xf32>
      %cst_51 = arith.constant 1.000000e+00 : f32
      %62 = vector.broadcast %cst_51 : f32 to vector<8x128xf32>
      %63 = arith.addf %62, %61 : vector<8x128xf32>
      %64 = arith.divf %62, %63 : vector<8x128xf32>
      %65 = arith.mulf %56, %arg16 : vector<8x128xf32>
      %66 = arith.mulf %50, %58 : vector<8x128xf32>
      %67 = arith.addf %65, %66 : vector<8x128xf32>
      %68 = math.tanh %67 : vector<8x128xf32>
      %69 = arith.mulf %64, %68 : vector<8x128xf32>
      %70 = arith.index_cast %39 : i32 to index
      %c0_52 = arith.constant 0 : index
      %71 = vector.load %arg13[%70, %c0_52] : memref<64x128xf32, #tpu.memory_space<vmem>>, vector<8x128xf32>
      tpu.vector_store %arg13[%70, %c0_52], %69 {strides = array<i32>} : memref<64x128xf32, #tpu.memory_space<vmem>>, vector<8x128xf32>,
      scf.yield %69, %67 : vector<8x128xf32>, vector<8x128xf32>
    }
    %c8_i32_13 = arith.constant 8 : i32
    %c0_14 = arith.constant 0 : index
    %c0_15 = arith.constant 0 : index
    %c0_16 = arith.constant 0 : index
    %13 = vector.load %arg10[%c0_14, %c0_15, %c0_16] : memref<2x8x128xf32, #tpu.memory_space<vmem>>, vector<1x8x128xf32>
    %14 = vector.shape_cast %13 : vector<1x8x128xf32> to vector<8x128xf32>
    %15 = vector.shape_cast %12#0 : vector<8x128xf32> to vector<1x8x128xf32>
    tpu.vector_store %arg10[%c0_14, %c0_15, %c0_16], %15 {strides = array<i32>} : memref<2x8x128xf32, #tpu.memory_space<vmem>>, vector<1x8x128xf32>,
    %c0_17 = arith.constant 0 : index
    %c0_18 = arith.constant 0 : index
    %c0_19 = arith.constant 0 : index
    %16 = vector.load %arg11[%c0_17, %c0_18, %c0_19] : memref<2x8x128xf32, #tpu.memory_space<vmem>>, vector<1x8x128xf32>
    %17 = vector.shape_cast %16 : vector<1x8x128xf32> to vector<8x128xf32>
    %18 = vector.shape_cast %12#1 : vector<8x128xf32> to vector<1x8x128xf32>
    tpu.vector_store %arg11[%c0_17, %c0_18, %c0_19], %18 {strides = array<i32>} : memref<2x8x128xf32, #tpu.memory_space<vmem>>, vector<1x8x128xf32>,
    %c0_20 = arith.constant 0 : index
    %c0_21 = arith.constant 0 : index
    %19 = vector.load %arg13[%c0_20, %c0_21] : memref<64x128xf32, #tpu.memory_space<vmem>>, vector<64x128xf32>
    %c0_22 = arith.constant 0 : index
    %c0_23 = arith.constant 0 : index
    %20 = vector.load %arg6[%c0_22, %c0_23] : memref<128x512xf32, #tpu.memory_space<vmem>>, vector<128x512xf32>
    %cst_24 = arith.constant dense<0.000000e+00> : vector<64x512xf32>
    %21 = tpu.matmul %19, %20, %cst_24 {dimension_numbers = #tpu.dot_dimension_numbers<[1], [0], [0], [1], [0, 0, 1, 1], [], []>} : vector<64x128xf32>, vector<128x512xf32>, vector<64x512xf32> -> vector<64x512xf32>
    %c0_25 = arith.constant 0 : index
    %c0_26 = arith.constant 0 : index
    %22 = vector.load %arg8[%c0_25, %c0_26] : memref<1x512xf32, #tpu.memory_space<vmem>>, vector<1x512xf32>
    %23 = vector.broadcast %22 : vector<1x512xf32> to vector<64x512xf32>
    %24 = arith.addf %21, %23 : vector<64x512xf32>
    %c0_27 = arith.constant 0 : index
    %c0_28 = arith.constant 0 : index
    %25 = vector.load %arg12[%c0_27, %c0_28] : memref<64x512xf32, #tpu.memory_space<vmem>>, vector<64x512xf32>
    tpu.vector_store %arg12[%c0_27, %c0_28], %24 {strides = array<i32>} : memref<64x512xf32, #tpu.memory_space<vmem>>, vector<64x512xf32>,
    %c1 = arith.constant 1 : index
    %c0_29 = arith.constant 0 : index
    %c0_30 = arith.constant 0 : index
    %26 = vector.load %arg1[%c1, %c0_29, %c0_30] : memref<2x8x128xf32, #tpu.memory_space<vmem>>, vector<1x8x128xf32>
    %27 = vector.shape_cast %26 : vector<1x8x128xf32> to vector<8x128xf32>
    %c1_31 = arith.constant 1 : index
    %c0_32 = arith.constant 0 : index
    %c0_33 = arith.constant 0 : index
    %28 = vector.load %arg2[%c1_31, %c0_32, %c0_33] : memref<2x8x128xf32, #tpu.memory_space<vmem>>, vector<1x8x128xf32>
    %29 = vector.shape_cast %28 : vector<1x8x128xf32> to vector<8x128xf32>
    %c0_i32_34 = arith.constant 0 : i32
    %c8_i32_35 = arith.constant 8 : i32
    %30 = arith.addi %c0_i32_34, %c8_i32_35 : i32
    %c1_i32_36 = arith.constant 1 : i32
    %31:2 = scf.for %arg14 = %c0_i32_34 to %30 step %c1_i32_36 iter_args(%arg15 = %27, %arg16 = %29) -> (vector<8x128xf32>, vector<8x128xf32>)  : i32 {
      %c8_i32_44 = arith.constant 8 : i32
      %38 = arith.muli %arg14, %c8_i32_44 : i32
      %39 = tpu.assume_multiple %38, 8 : i32
      %40 = arith.index_cast %39 : i32 to index
      %c0_45 = arith.constant 0 : index
      %41 = vector.load %arg12[%40, %c0_45] : memref<64x512xf32, #tpu.memory_space<vmem>>, vector<8x512xf32>
      %c0_46 = arith.constant 0 : index
      %c0_47 = arith.constant 0 : index
      %42 = vector.load %arg7[%c0_46, %c0_47] : memref<128x512xf32, #tpu.memory_space<vmem>>, vector<128x512xf32>
      %cst_48 = arith.constant dense<0.000000e+00> : vector<8x512xf32>
      %43 = tpu.matmul %arg15, %42, %cst_48 {dimension_numbers = #tpu.dot_dimension_numbers<[1], [0], [0], [1], [0, 0, 1, 1], [], []>} : vector<8x128xf32>, vector<128x512xf32>, vector<8x512xf32> -> vector<8x512xf32>
      %44 = arith.addf %41, %43 : vector<8x512xf32>
      %45 = vector.extract_strided_slice %44 {offsets = [0, 0], sizes = [8, 128], strides = [1, 1]} : vector<8x512xf32> to vector<8x128xf32>
      %46 = arith.negf %45 : vector<8x128xf32>
      %47 = math.exp %46 : vector<8x128xf32>
      %cst_49 = arith.constant 1.000000e+00 : f32
      %48 = vector.broadcast %cst_49 : f32 to vector<8x128xf32>
      %49 = arith.addf %48, %47 : vector<8x128xf32>
      %50 = arith.divf %48, %49 : vector<8x128xf32>
      %51 = vector.extract_strided_slice %44 {offsets = [0, 128], sizes = [8, 128], strides = [1, 1]} : vector<8x512xf32> to vector<8x128xf32>
      %52 = arith.negf %51 : vector<8x128xf32>
      %53 = math.exp %52 : vector<8x128xf32>
      %cst_50 = arith.constant 1.000000e+00 : f32
      %54 = vector.broadcast %cst_50 : f32 to vector<8x128xf32>
      %55 = arith.addf %54, %53 : vector<8x128xf32>
      %56 = arith.divf %54, %55 : vector<8x128xf32>
      %57 = vector.extract_strided_slice %44 {offsets = [0, 256], sizes = [8, 128], strides = [1, 1]} : vector<8x512xf32> to vector<8x128xf32>
      %58 = math.tanh %57 : vector<8x128xf32>
      %59 = vector.extract_strided_slice %44 {offsets = [0, 384], sizes = [8, 128], strides = [1, 1]} : vector<8x512xf32> to vector<8x128xf32>
      %60 = arith.negf %59 : vector<8x128xf32>
      %61 = math.exp %60 : vector<8x128xf32>
      %cst_51 = arith.constant 1.000000e+00 : f32
      %62 = vector.broadcast %cst_51 : f32 to vector<8x128xf32>
      %63 = arith.addf %62, %61 : vector<8x128xf32>
      %64 = arith.divf %62, %63 : vector<8x128xf32>
      %65 = arith.mulf %56, %arg16 : vector<8x128xf32>
      %66 = arith.mulf %50, %58 : vector<8x128xf32>
      %67 = arith.addf %65, %66 : vector<8x128xf32>
      %68 = math.tanh %67 : vector<8x128xf32>
      %69 = arith.mulf %64, %68 : vector<8x128xf32>
      %70 = arith.index_cast %39 : i32 to index
      %c0_52 = arith.constant 0 : index
      %71 = vector.load %arg9[%70, %c0_52] : memref<64x128xf32, #tpu.memory_space<vmem>>, vector<8x128xf32>
      tpu.vector_store %arg9[%70, %c0_52], %69 {strides = array<i32>} : memref<64x128xf32, #tpu.memory_space<vmem>>, vector<8x128xf32>,
      scf.yield %69, %67 : vector<8x128xf32>, vector<8x128xf32>
    }
    %c8_i32_37 = arith.constant 8 : i32
    %c1_38 = arith.constant 1 : index
    %c0_39 = arith.constant 0 : index
    %c0_40 = arith.constant 0 : index
    %32 = vector.load %arg10[%c1_38, %c0_39, %c0_40] : memref<2x8x128xf32, #tpu.memory_space<vmem>>, vector<1x8x128xf32>
    %33 = vector.shape_cast %32 : vector<1x8x128xf32> to vector<8x128xf32>
    %34 = vector.shape_cast %31#0 : vector<8x128xf32> to vector<1x8x128xf32>
    tpu.vector_store %arg10[%c1_38, %c0_39, %c0_40], %34 {strides = array<i32>} : memref<2x8x128xf32, #tpu.memory_space<vmem>>, vector<1x8x128xf32>,
    %c1_41 = arith.constant 1 : index
    %c0_42 = arith.constant 0 : index
    %c0_43 = arith.constant 0 : index
    %35 = vector.load %arg11[%c1_41, %c0_42, %c0_43] : memref<2x8x128xf32, #tpu.memory_space<vmem>>, vector<1x8x128xf32>
    %36 = vector.shape_cast %35 : vector<1x8x128xf32> to vector<8x128xf32>
    %37 = vector.shape_cast %31#1 : vector<8x128xf32> to vector<1x8x128xf32>
    tpu.vector_store %arg11[%c1_41, %c0_42, %c0_43], %37 {strides = array<i32>} : memref<2x8x128xf32, #tpu.memory_space<vmem>>, vector<1x8x128xf32>,
    return
  }
}

module attributes {stable_mosaic.version = 11 : i64} {
  func.func @kernel(%arg0: i32, %arg1: i32, %arg2: memref<16x32xf32, #tpu.memory_space<vmem>>, %arg3: memref<32x128xf32, #tpu.memory_space<vmem>>, %arg4: memref<1x128xf32, #tpu.memory_space<vmem>>, %arg5: memref<16x128xf32, #tpu.memory_space<vmem>>) attributes {dimension_semantics = [#tpu.dimension_semantics<parallel>, #tpu.dimension_semantics<parallel>], iteration_bounds = array<i64: 1, 1>, scalar_prefetch = 0 : i64, scratch_operands = 0 : i64, tpu.core_type = #tpu.core_type<tc>, window_params = [{transform_indices = @transform_0, window_bounds = array<i64: 16, 32>}, {transform_indices = @transform_1, window_bounds = array<i64: 32, 128>}, {transform_indices = @transform_2, window_bounds = array<i64: 1, 128>}, {transform_indices = @transform_3, window_bounds = array<i64: 16, 128>}]} {
    %c0 = arith.constant 0 : index
    %c0_0 = arith.constant 0 : index
    %0 = vector.load %arg2[%c0, %c0_0] : memref<16x32xf32, #tpu.memory_space<vmem>>, vector<16x32xf32>
    %c0_1 = arith.constant 0 : index
    %c0_2 = arith.constant 0 : index
    %1 = vector.load %arg3[%c0_1, %c0_2] : memref<32x128xf32, #tpu.memory_space<vmem>>, vector<32x128xf32>
    %cst = arith.constant dense<0.000000e+00> : vector<16x128xf32>
    %2 = tpu.matmul %0, %1, %cst {dimension_numbers = #tpu.dot_dimension_numbers<[1], [0], [0], [1], [0, 0, 1, 1], [], []>} : vector<16x32xf32>, vector<32x128xf32>, vector<16x128xf32> -> vector<16x128xf32>
    %c0_3 = arith.constant 0 : index
    %c0_4 = arith.constant 0 : index
    %3 = vector.load %arg4[%c0_3, %c0_4] : memref<1x128xf32, #tpu.memory_space<vmem>>, vector<1x128xf32>
    %4 = vector.broadcast %3 : vector<1x128xf32> to vector<16x128xf32>
    %5 = arith.addf %2, %4 : vector<16x128xf32>
    %c0_5 = arith.constant 0 : index
    %c0_6 = arith.constant 0 : index
    %6 = vector.load %arg5[%c0_5, %c0_6] : memref<16x128xf32, #tpu.memory_space<vmem>>, vector<16x128xf32>
    tpu.vector_store %arg5[%c0_5, %c0_6], %5 {strides = array<i32>} : memref<16x128xf32, #tpu.memory_space<vmem>>, vector<16x128xf32>,
    return
  }
  func.func @transform_0(%arg0: i32, %arg1: i32) -> (i32, i32) {
    %c0_i32 = arith.constant 0 : i32
    %c0_i32_0 = arith.constant 0 : i32
    return %arg0, %c0_i32 : i32, i32
  }
  func.func @transform_1(%arg0: i32, %arg1: i32) -> (i32, i32) {
    %c0_i32 = arith.constant 0 : i32
    %c0_i32_0 = arith.constant 0 : i32
    return %c0_i32, %arg1 : i32, i32
  }
  func.func @transform_2(%arg0: i32, %arg1: i32) -> (i32, i32) {
    %c0_i32 = arith.constant 0 : i32
    %c0_i32_0 = arith.constant 0 : i32
    return %c0_i32, %arg1 : i32, i32
  }
  func.func @transform_3(%arg0: i32, %arg1: i32) -> (i32, i32) {
    %c0_i32 = arith.constant 0 : i32
    return %arg0, %arg1 : i32, i32
  }
}

</mosaic_0001>

<llo_original>
// kernel: char_nlm_forward.5
$region0: #{char_nlm_forward.5}
  #allocation0 [shape = 'u32[]', space=smem, size = 0x4, offset = 0x4, fixed_abs, tag = 'smem constant byte address 0x4 - core index']
  #allocation1 [shape = 'u32[72,128]{1,0:T(1,128)}', space=vmem, size = 0x9000, scoped, tag = 'internal scratch']
  %s0 = inlined_call_operand.vmem [shape: f32[16,32], index: 0, kind: input, shape index: {}]
  %s1 = inlined_call_operand.vmem [shape: f32[32,128], index: 1, kind: input, shape index: {}]
  %s2 = inlined_call_operand.vmem [shape: f32[1,128], index: 2, kind: input, shape index: {}]
  %s3 = inlined_call_operand.hbm [shape: f32[16,128], index: 3, kind: output, shape index: {}]
  %s4 = sld [smem:[#allocation0]]
  $region22: #{char_nlm_forward.5} parent=0
    _
  %s6 = ssub.s32 1, %s4
  %s7 = scalar_select 0, %s6, %s4
  $region1: #{char_nlm_forward.5} parent=0
    #allocation2 [shape = 'u8[8192]{0}', space=vmem, size = 0x2000, scoped, tag = 'output window, operand 0, single buffered']
    #allocation3 [shape = 's32[1]{0}', space=sflag, size = 0x4, scoped, tag = 'scoped memory for char_nlm_forward.5']
    %8 = vsyncpa [#allocation3], 0
    // Predicated region
    $region2: #{char_nlm_forward.5} parent=1 // pred_check
      _
    $region3: #{char_nlm_forward.5} parent=1 // pred_check_branch
      %10 = sbr.rel (0) target = $region5
    $region4: #{char_nlm_forward.5} parent=1 // pred_region
      _
    $region5: #{char_nlm_forward.5} parent=1 // pred_fallthru
      _
    // Predicated region
    $region6: #{char_nlm_forward.5} parent=1 // pred_check
      _
    $region7: #{char_nlm_forward.5} parent=1 // pred_check_branch
      %12 = sbr.rel (0) target = $region9
    $region8: #{char_nlm_forward.5} parent=1 // pred_region
      _
    $region9: #{char_nlm_forward.5} parent=1 // pred_fallthru
      _
    // Predicated region
    $region10: #{char_nlm_forward.5} parent=1 // pred_check
      _
    $region11: #{char_nlm_forward.5} parent=1 // pred_check_branch
      %14 = sbr.rel (0) target = $region13
    $region12: #{char_nlm_forward.5} parent=1 // pred_region
      _
    $region13: #{char_nlm_forward.5} parent=1 // pred_fallthru
      _
    %v15 = vld [vmem:[%s0] sm:$0xff]
    %v16 = vld [vmem:[%s0 + $0x8] sm:$0xff]
    %v17 = vld [vmem:[%s1] sm:$0xff]
    %v18 = vld [vmem:[%s1 + $0x8] sm:$0xff]
    %v19 = vld [vmem:[%s1 + $0x10] sm:$0xff]
    %v20 = vld [vmem:[%s1 + $0x18] sm:$0xff]
    %v21 = vld [vmem:[%s2] sm:$0x1]
    %v23 = vperm.slane %v21, 0
    %vm25 = vcmask 261120
    %v27 = vsel %vm25, %v15, 0
    %v30 = vsel %vm25, %v16, 0
    %32 = vmatpush.msra.mxu0 0.0
    %33 = vmatpush.msra.mxu0 0.0
    %34 = vmatpush.msra.mxu0 0.0
    %35 = vmatpush.msra.mxu0 0.0
    %36 = vmatpush.msra.mxu0 0.0
    %37 = vmatpush.msra.mxu0 0.0
    %38 = vmatpush.msra.mxu0 0.0
    %39 = vmatpush.msra.mxu0 0.0
    %40 = vmatpush.msra.mxu0 0.0
    %41 = vmatpush.msra.mxu0 0.0
    %42 = vmatpush.msra.mxu0 0.0
    %43 = vmatpush.msra.mxu0 0.0
    %44 = vmatpush.msra.mxu0 %v20
    %45 = vmatpush.msra.mxu0 %v19
    %46 = vmatpush.msra.mxu0 %v18
    %47 = vmatpush.msra.mxu0 %v17
    %48 = vmatmul.f32.gmra.mxu0 %v27
    %v49 = vpop.f32.mrf.mxu0
    %v50 = vadd.f32 %v23, %v49
    %51 = vmatmul.f32.gmra.mxu0 %v30
    %v52 = vpop.f32.mrf.mxu0
    %v53 = vadd.f32 %v23, %v52
    %54 = vdwg.mxu0
    %55 = vst [vmem:[#allocation2] sm:$0xff] %v50
    %56 = vst [vmem:[#allocation2 + $0x8] sm:$0xff] %v53
    // Predicated region
    $region14: #{char_nlm_forward.5} parent=1 // pred_check
      _
    $region15: #{char_nlm_forward.5} parent=1 // pred_check_branch
      %58 = sbr.rel (0) target = $region17
    $region16: #{char_nlm_forward.5} parent=1 // pred_region
      %60 = vsyncadd [#allocation3], 0
      %s61 = sshll.u32 [#allocation2], 4
      %s62 = int_to_ptr.vmem [resolvable:$true] %s61
      %s63 = sshll.u32 %s3, 4
      %s64 = int_to_ptr.hbm [resolvable:$true] %s63
      %69 = dma.vmem_to_hbm [thread:$0]  %s62, 256, %s64, [#allocation3], 128, 128, 8
    $region17: #{char_nlm_forward.5} parent=1 // pred_fallthru
      _
    // Predicated region
    $region18: #{char_nlm_forward.5} parent=1 // pred_check
      _
    $region19: #{char_nlm_forward.5} parent=1 // pred_check_branch
      %71 = sbr.rel (0) target = $region21
    $region20: #{char_nlm_forward.5} parent=1 // pred_region
      %73 = dma.done [#allocation3], 256
    $region21: #{char_nlm_forward.5} parent=1 // pred_fallthru
      _
    %74 = vsyncpa [#allocation3], 1

// kernel: char_nlm_forward.3
$region0: #{char_nlm_forward.3}
  #allocation0 [shape = 'u32[]', space=smem, size = 0x4, offset = 0x4, fixed_abs, tag = 'smem constant byte address 0x4 - core index']
  #allocation1 [shape = 'u32[72,128]{1,0:T(1,128)}', space=vmem, size = 0x9000, scoped, tag = 'internal scratch']
  %s0 = inlined_call_operand.vmem [shape: f32[16,160], index: 0, kind: input, shape index: {}]
  %s1 = inlined_call_operand.vmem [shape: f32[160,1152], index: 1, kind: input, shape index: {}]
  %s2 = inlined_call_operand.vmem [shape: f32[1,128], index: 2, kind: input, shape index: {}]
  %s3 = inlined_call_operand.vmem [shape: f32[128,256], index: 3, kind: input, shape index: {}]
  %s4 = inlined_call_operand.vmem [shape: f32[1,256], index: 4, kind: input, shape index: {}]
  %s5 = inlined_call_operand.vmem [shape: f32[16,128], index: 5, kind: output, shape index: {}]
  %s6 = sld [smem:[#allocation0]]
  $region30: #{char_nlm_forward.3} parent=0
    _
  %s8 = ssub.s32 1, %s6
  %s9 = scalar_select 0, %s8, %s6
  // Predicated region
  $region2: #{char_nlm_forward.3} parent=0 // pred_check
    _
  $region3: #{char_nlm_forward.3} parent=0 // pred_check_branch
    %11 = sbr.rel (0) target = $region5
  $region4: #{char_nlm_forward.3} parent=0 // pred_region
    _
  $region5: #{char_nlm_forward.3} parent=0 // pred_fallthru
    _
  // Predicated region
  $region6: #{char_nlm_forward.3} parent=0 // pred_check
    _
  $region7: #{char_nlm_forward.3} parent=0 // pred_check_branch
    %13 = sbr.rel (0) target = $region9
  $region8: #{char_nlm_forward.3} parent=0 // pred_region
    _
  $region9: #{char_nlm_forward.3} parent=0 // pred_fallthru
    _
  // Predicated region
  $region10: #{char_nlm_forward.3} parent=0 // pred_check
    _
  $region11: #{char_nlm_forward.3} parent=0 // pred_check_branch
    %15 = sbr.rel (0) target = $region13
  $region12: #{char_nlm_forward.3} parent=0 // pred_region
    _
  $region13: #{char_nlm_forward.3} parent=0 // pred_fallthru
    _
  // Predicated region
  $region14: #{char_nlm_forward.3} parent=0 // pred_check
    _
  $region15: #{char_nlm_forward.3} parent=0 // pred_check_branch
    %17 = sbr.rel (0) target = $region17
  $region16: #{char_nlm_forward.3} parent=0 // pred_region
    _
  $region17: #{char_nlm_forward.3} parent=0 // pred_fallthru
    _
  // Predicated region
  $region18: #{char_nlm_forward.3} parent=0 // pred_check
    _
  $region19: #{char_nlm_forward.3} parent=0 // pred_check_branch
    %19 = sbr.rel (0) target = $region21
  $region20: #{char_nlm_forward.3} parent=0 // pred_region
    _
  $region21: #{char_nlm_forward.3} parent=0 // pred_fallthru
    _
  %v20 = vld [vmem:[%s0] sm:$0xff]
  %v21 = vld [vmem:[%s0 + $0x8] sm:$0xff]
  %v22 = vld [vmem:[%s0 + $0x10] sm:$0xff]
  %v23 = vld [vmem:[%s0 + $0x18] sm:$0xff]
  %v24 = vld [vmem:[%s1] sm:$0xff]
  %v25 = vld [vmem:[%s1 + $0x8] sm:$0xff]
  %v26 = vld [vmem:[%s1 + $0x10] sm:$0xff]
  %v27 = vld [vmem:[%s1 + $0x18] sm:$0xff]
  %v28 = vld [vmem:[%s1 + $0x20] sm:$0xff]
  %v29 = vld [vmem:[%s1 + $0x28] sm:$0xff]
  %v30 = vld [vmem:[%s1 + $0x30] sm:$0xff]
  %v31 = vld [vmem:[%s1 + $0x38] sm:$0xff]
  %v32 = vld [vmem:[%s1 + $0x40] sm:$0xff]
  %v33 = vld [vmem:[%s1 + $0x48] sm:$0xff]
  %v34 = vld [vmem:[%s1 + $0x50] sm:$0xff]
  %v35 = vld [vmem:[%s1 + $0x58] sm:$0xff]
  %v36 = vld [vmem:[%s1 + $0x60] sm:$0xff]
  %v37 = vld [vmem:[%s1 + $0x68] sm:$0xff]
  %v38 = vld [vmem:[%s1 + $0x70] sm:$0xff]
  %v39 = vld [vmem:[%s1 + $0x78] sm:$0xff]
  %v40 = vld [vmem:[%s1 + $0x80] sm:$0xff]
  %v41 = vld [vmem:[%s1 + $0x88] sm:$0xff]
  %v42 = vld [vmem:[%s1 + $0x90] sm:$0xff]
  %v43 = vld [vmem:[%s1 + $0x98] sm:$0xff]
  %v44 = vld [vmem:[%s1 + $0xa0] sm:$0xff]
  %v45 = vld [vmem:[%s1 + $0xa8] sm:$0xff]
  %v46 = vld [vmem:[%s1 + $0xb0] sm:$0xff]
  %v47 = vld [vmem:[%s1 + $0xb8] sm:$0xff]
  %v48 = vld [vmem:[%s1 + $0xc0] sm:$0xff]
  %v49 = vld [vmem:[%s1 + $0xc8] sm:$0xff]
  %v50 = vld [vmem:[%s1 + $0xd0] sm:$0xff]
  %v51 = vld [vmem:[%s1 + $0xd8] sm:$0xff]
  %v52 = vld [vmem:[%s1 + $0xe0] sm:$0xff]
  %v53 = vld [vmem:[%s1 + $0xe8] sm:$0xff]
  %v54 = vld [vmem:[%s1 + $0xf0] sm:$0xff]
  %v55 = vld [vmem:[%s1 + $0xf8] sm:$0xff]
  %v56 = vld [vmem:[%s1 + $0x100] sm:$0xff]
  %v57 = vld [vmem:[%s1 + $0x108] sm:$0xff]
  %v58 = vld [vmem:[%s1 + $0x110] sm:$0xff]
  %v59 = vld [vmem:[%s1 + $0x118] sm:$0xff]
  %v60 = vld [vmem:[%s1 + $0x120] sm:$0xff]
  %v61 = vld [vmem:[%s1 + $0x128] sm:$0xff]
  %v62 = vld [vmem:[%s1 + $0x130] sm:$0xff]
  %v63 = vld [vmem:[%s1 + $0x138] sm:$0xff]
  %v64 = vld [vmem:[%s1 + $0x140] sm:$0xff]
  %v65 = vld [vmem:[%s1 + $0x148] sm:$0xff]
  %v66 = vld [vmem:[%s1 + $0x150] sm:$0xff]
  %v67 = vld [vmem:[%s1 + $0x158] sm:$0xff]
  %v68 = vld [vmem:[%s1 + $0x160] sm:$0xff]
  %v69 = vld [vmem:[%s1 + $0x168] sm:$0xff]
  %v70 = vld [vmem:[%s1 + $0x170] sm:$0xff]
  %v71 = vld [vmem:[%s1 + $0x178] sm:$0xff]
  %v72 = vld [vmem:[%s1 + $0x180] sm:$0xff]
  %v73 = vld [vmem:[%s1 + $0x188] sm:$0xff]
  %v74 = vld [vmem:[%s1 + $0x190] sm:$0xff]
  %v75 = vld [vmem:[%s1 + $0x198] sm:$0xff]
  %v76 = vld [vmem:[%s1 + $0x1a0] sm:$0xff]
  %v77 = vld [vmem:[%s1 + $0x1a8] sm:$0xff]
  %v78 = vld [vmem:[%s1 + $0x1b0] sm:$0xff]
  %v79 = vld [vmem:[%s1 + $0x1b8] sm:$0xff]
  %v80 = vld [vmem:[%s1 + $0x1c0] sm:$0xff]
  %v81 = vld [vmem:[%s1 + $0x1c8] sm:$0xff]
  %v82 = vld [vmem:[%s1 + $0x1d0] sm:$0xff]
  %v83 = vld [vmem:[%s1 + $0x1d8] sm:$0xff]
  %v84 = vld [vmem:[%s1 + $0x1e0] sm:$0xff]
  %v85 = vld [vmem:[%s1 + $0x1e8] sm:$0xff]
  %v86 = vld [vmem:[%s1 + $0x1f0] sm:$0xff]
  %v87 = vld [vmem:[%s1 + $0x1f8] sm:$0xff]
  %v88 = vld [vmem:[%s1 + $0x200] sm:$0xff]
  %v89 = vld [vmem:[%s1 + $0x208] sm:$0xff]
  %v90 = vld [vmem:[%s1 + $0x210] sm:$0xff]
  %v91 = vld [vmem:[%s1 + $0x218] sm:$0xff]
  %v92 = vld [vmem:[%s1 + $0x220] sm:$0xff]
  %v93 = vld [vmem:[%s1 + $0x228] sm:$0xff]
  %v94 = vld [vmem:[%s1 + $0x230] sm:$0xff]
  %v95 = vld [vmem:[%s1 + $0x238] sm:$0xff]
  %v96 = vld [vmem:[%s1 + $0x240] sm:$0xff]
  %v97 = vld [vmem:[%s1 + $0x248] sm:$0xff]
  %v98 = vld [vmem:[%s1 + $0x250] sm:$0xff]
  %v99 = vld [vmem:[%s1 + $0x258] sm:$0xff]
  %v100 = vld [vmem:[%s1 + $0x260] sm:$0xff]
  %v101 = vld [vmem:[%s1 + $0x268] sm:$0xff]
  %v102 = vld [vmem:[%s1 + $0x270] sm:$0xff]
  %v103 = vld [vmem:[%s1 + $0x278] sm:$0xff]
  %v104 = vld [vmem:[%s1 + $0x280] sm:$0xff]
  %v105 = vld [vmem:[%s1 + $0x288] sm:$0xff]
  %v106 = vld [vmem:[%s1 + $0x290] sm:$0xff]
  %v107 = vld [vmem:[%s1 + $0x298] sm:$0xff]
  %v108 = vld [vmem:[%s1 + $0x2a0] sm:$0xff]
  %v109 = vld [vmem:[%s1 + $0x2a8] sm:$0xff]
  %v110 = vld [vmem:[%s1 + $0x2b0] sm:$0xff]
  %v111 = vld [vmem:[%s1 + $0x2b8] sm:$0xff]
  %v112 = vld [vmem:[%s1 + $0x2c0] sm:$0xff]
  %v113 = vld [vmem:[%s1 + $0x2c8] sm:$0xff]
  %v114 = vld [vmem:[%s1 + $0x2d0] sm:$0xff]
  %v115 = vld [vmem:[%s1 + $0x2d8] sm:$0xff]
  %v116 = vld [vmem:[%s1 + $0x2e0] sm:$0xff]
  %v117 = vld [vmem:[%s1 + $0x2e8] sm:$0xff]
  %v118 = vld [vmem:[%s1 + $0x2f0] sm:$0xff]
  %v119 = vld [vmem:[%s1 + $0x2f8] sm:$0xff]
  %v120 = vld [vmem:[%s1 + $0x300] sm:$0xff]
  %v121 = vld [vmem:[%s1 + $0x308] sm:$0xff]
  %v122 = vld [vmem:[%s1 + $0x310] sm:$0xff]
  %v123 = vld [vmem:[%s1 + $0x318] sm:$0xff]
  %v124 = vld [vmem:[%s1 + $0x320] sm:$0xff]
  %v125 = vld [vmem:[%s1 + $0x328] sm:$0xff]
  %v126 = vld [vmem:[%s1 + $0x330] sm:$0xff]
  %v127 = vld [vmem:[%s1 + $0x338] sm:$0xff]
  %v128 = vld [vmem:[%s1 + $0x340] sm:$0xff]
  %v129 = vld [vmem:[%s1 + $0x348] sm:$0xff]
  %v130 = vld [vmem:[%s1 + $0x350] sm:$0xff]
  %v131 = vld [vmem:[%s1 + $0x358] sm:$0xff]
  %v132 = vld [vmem:[%s1 + $0x360] sm:$0xff]
  %v133 = vld [vmem:[%s1 + $0x368] sm:$0xff]
  %v134 = vld [vmem:[%s1 + $0x370] sm:$0xff]
  %v135 = vld [vmem:[%s1 + $0x378] sm:$0xff]
  %v136 = vld [vmem:[%s1 + $0x380] sm:$0xff]
  %v137 = vld [vmem:[%s1 + $0x388] sm:$0xff]
  %v138 = vld [vmem:[%s1 + $0x390] sm:$0xff]
  %v139 = vld [vmem:[%s1 + $0x398] sm:$0xff]
  %v140 = vld [vmem:[%s1 + $0x3a0] sm:$0xff]
  %v141 = vld [vmem:[%s1 + $0x3a8] sm:$0xff]
  %v142 = vld [vmem:[%s1 + $0x3b0] sm:$0xff]
  %v143 = vld [vmem:[%s1 + $0x3b8] sm:$0xff]
  %v144 = vld [vmem:[%s1 + $0x3c0] sm:$0xff]
  %v145 = vld [vmem:[%s1 + $0x3c8] sm:$0xff]
  %v146 = vld [vmem:[%s1 + $0x3d0] sm:$0xff]
  %v147 = vld [vmem:[%s1 + $0x3d8] sm:$0xff]
  %v148 = vld [vmem:[%s1 + $0x3e0] sm:$0xff]
  %v149 = vld [vmem:[%s1 + $0x3e8] sm:$0xff]
  %v150 = vld [vmem:[%s1 + $0x3f0] sm:$0xff]
  %v151 = vld [vmem:[%s1 + $0x3f8] sm:$0xff]
  %v152 = vld [vmem:[%s1 + $0x400] sm:$0xff]
  %v153 = vld [vmem:[%s1 + $0x408] sm:$0xff]
  %v154 = vld [vmem:[%s1 + $0x410] sm:$0xff]
  %v155 = vld [vmem:[%s1 + $0x418] sm:$0xff]
  %v156 = vld [vmem:[%s1 + $0x420] sm:$0xff]
  %v157 = vld [vmem:[%s1 + $0x428] sm:$0xff]
  %v158 = vld [vmem:[%s1 + $0x430] sm:$0xff]
  %v159 = vld [vmem:[%s1 + $0x438] sm:$0xff]
  %v160 = vld [vmem:[%s1 + $0x440] sm:$0xff]
  %v161 = vld [vmem:[%s1 + $0x448] sm:$0xff]
  %v162 = vld [vmem:[%s1 + $0x450] sm:$0xff]
  %v163 = vld [vmem:[%s1 + $0x458] sm:$0xff]
  %v164 = vld [vmem:[%s1 + $0x460] sm:$0xff]
  %v165 = vld [vmem:[%s1 + $0x468] sm:$0xff]
  %v166 = vld [vmem:[%s1 + $0x470] sm:$0xff]
  %v167 = vld [vmem:[%s1 + $0x478] sm:$0xff]
  %v168 = vld [vmem:[%s1 + $0x480] sm:$0xff]
  %v169 = vld [vmem:[%s1 + $0x488] sm:$0xff]
  %v170 = vld [vmem:[%s1 + $0x490] sm:$0xff]
  %v171 = vld [vmem:[%s1 + $0x498] sm:$0xff]
  %v172 = vld [vmem:[%s1 + $0x4a0] sm:$0xff]
  %v173 = vld [vmem:[%s1 + $0x4a8] sm:$0xff]
  %v174 = vld [vmem:[%s1 + $0x4b0] sm:$0xff]
  %v175 = vld [vmem:[%s1 + $0x4b8] sm:$0xff]
  %v176 = vld [vmem:[%s1 + $0x4c0] sm:$0xff]
  %v177 = vld [vmem:[%s1 + $0x4c8] sm:$0xff]
  %v178 = vld [vmem:[%s1 + $0x4d0] sm:$0xff]
  %v179 = vld [vmem:[%s1 + $0x4d8] sm:$0xff]
  %v180 = vld [vmem:[%s1 + $0x4e0] sm:$0xff]
  %v181 = vld [vmem:[%s1 + $0x4e8] sm:$0xff]
  %v182 = vld [vmem:[%s1 + $0x4f0] sm:$0xff]
  %v183 = vld [vmem:[%s1 + $0x4f8] sm:$0xff]
  %v184 = vld [vmem:[%s1 + $0x500] sm:$0xff]
  %v185 = vld [vmem:[%s1 + $0x508] sm:$0xff]
  %v186 = vld [vmem:[%s1 + $0x510] sm:$0xff]
  %v187 = vld [vmem:[%s1 + $0x518] sm:$0xff]
  %v188 = vld [vmem:[%s1 + $0x520] sm:$0xff]
  %v189 = vld [vmem:[%s1 + $0x528] sm:$0xff]
  %v190 = vld [vmem:[%s1 + $0x530] sm:$0xff]
  %v191 = vld [vmem:[%s1 + $0x538] sm:$0xff]
  %v192 = vld [vmem:[%s1 + $0x540] sm:$0xff]
  %v193 = vld [vmem:[%s1 + $0x548] sm:$0xff]
  %v194 = vld [vmem:[%s1 + $0x550] sm:$0xff]
  %v195 = vld [vmem:[%s1 + $0x558] sm:$0xff]
  %v196 = vld [vmem:[%s1 + $0x560] sm:$0xff]
  %v197 = vld [vmem:[%s1 + $0x568] sm:$0xff]
  %v198 = vld [vmem:[%s1 + $0x570] sm:$0xff]
  %v199 = vld [vmem:[%s1 + $0x578] sm:$0xff]
  %v200 = vld [vmem:[%s1 + $0x580] sm:$0xff]
  %v201 = vld [vmem:[%s1 + $0x588] sm:$0xff]
  %v202 = vld [vmem:[%s1 + $0x590] sm:$0xff]
  %v203 = vld [vmem:[%s1 + $0x598] sm:$0xff]
  %vm204 = vcmask 261120
  %v206 = vsel %vm204, %v21, 0
  %v209 = vsel %vm204, %v23, 0
  %211 = vmatpush.msra.mxu0 %v159
  %212 = vmatpush.msra.mxu0 %v150
  %213 = vmatpush.msra.mxu0 %v141
  %214 = vmatpush.msra.mxu0 %v132
  %215 = vmatpush.msra.mxu0 %v123
  %216 = vmatpush.msra.mxu0 %v114
  %217 = vmatpush.msra.mxu0 %v105
  %218 = vmatpush.msra.mxu0 %v96
  %219 = vmatpush.msra.mxu0 %v87
  %220 = vmatpush.msra.mxu0 %v78
  %221 = vmatpush.msra.mxu0 %v69
  %222 = vmatpush.msra.mxu0 %v60
  %223 = vmatpush.msra.mxu0 %v51
  %224 = vmatpush.msra.mxu0 %v42
  %225 = vmatpush.msra.mxu0 %v33
  %226 = vmatpush.msra.mxu0 %v24
  %227 = vmatmul.f32.gmra.mxu0 %v20
  %v228 = vpop.f32.mrf.mxu0
  %v229 = vadd.f32 0.0, %v228
  %230 = vmatmul.f32.gmra.mxu0 %v22
  %v231 = vpop.f32.mrf.mxu0
  %v232 = vadd.f32 0.0, %v231
  %233 = vdwg.mxu0
  %234 = vmatpush.msra.mxu0 0.0
  %235 = vmatpush.msra.mxu0 0.0
  %236 = vmatpush.msra.mxu0 0.0
  %237 = vmatpush.msra.mxu0 0.0
  %238 = vmatpush.msra.mxu0 0.0
  %239 = vmatpush.msra.mxu0 0.0
  %240 = vmatpush.msra.mxu0 0.0
  %241 = vmatpush.msra.mxu0 0.0
  %242 = vmatpush.msra.mxu0 0.0
  %243 = vmatpush.msra.mxu0 0.0
  %244 = vmatpush.msra.mxu0 0.0
  %245 = vmatpush.msra.mxu0 0.0
  %246 = vmatpush.msra.mxu0 %v195
  %247 = vmatpush.msra.mxu0 %v186
  %248 = vmatpush.msra.mxu0 %v177
  %249 = vmatpush.msra.mxu0 %v168
  %250 = vmatmul.f32.gmra.mxu0 %v206
  %v251 = vpop.f32.mrf.mxu0
  %v252 = vadd.f32 %v229, %v251
  %253 = vmatmul.f32.gmra.mxu0 %v209
  %v254 = vpop.f32.mrf.mxu0
  %v255 = vadd.f32 %v232, %v254
  %256 = vdwg.mxu0
  %257 = vmatpush.msra.mxu0 %v160
  %258 = vmatpush.msra.mxu0 %v151
  %259 = vmatpush.msra.mxu0 %v142
  %260 = vmatpush.msra.mxu0 %v133
  %261 = vmatpush.msra.mxu0 %v124
  %262 = vmatpush.msra.mxu0 %v115
  %263 = vmatpush.msra.mxu0 %v106
  %264 = vmatpush.msra.mxu0 %v97
  %265 = vmatpush.msra.mxu0 %v88
  %266 = vmatpush.msra.mxu0 %v79
  %267 = vmatpush.msra.mxu0 %v70
  %268 = vmatpush.msra.mxu0 %v61
  %269 = vmatpush.msra.mxu0 %v52
  %270 = vmatpush.msra.mxu0 %v43
  %271 = vmatpush.msra.mxu0 %v34
  %272 = vmatpush.msra.mxu0 %v25
  %273 = vmatmul.f32.gmra.mxu0 %v20
  %v274 = vpop.f32.mrf.mxu0
  %v275 = vadd.f32 0.0, %v274
  %276 = vmatmul.f32.gmra.mxu0 %v22
  %v277 = vpop.f32.mrf.mxu0
  %v278 = vadd.f32 0.0, %v277
  %279 = vdwg.mxu0
  %280 = vmatpush.msra.mxu0 0.0
  %281 = vmatpush.msra.mxu0 0.0
  %282 = vmatpush.msra.mxu0 0.0
  %283 = vmatpush.msra.mxu0 0.0
  %284 = vmatpush.msra.mxu0 0.0
  %285 = vmatpush.msra.mxu0 0.0
  %286 = vmatpush.msra.mxu0 0.0
  %287 = vmatpush.msra.mxu0 0.0
  %288 = vmatpush.msra.mxu0 0.0
  %289 = vmatpush.msra.mxu0 0.0
  %290 = vmatpush.msra.mxu0 0.0
  %291 = vmatpush.msra.mxu0 0.0
  %292 = vmatpush.msra.mxu0 %v196
  %293 = vmatpush.msra.mxu0 %v187
  %294 = vmatpush.msra.mxu0 %v178
  %295 = vmatpush.msra.mxu0 %v169
  %296 = vmatmul.f32.gmra.mxu0 %v206
  %v297 = vpop.f32.mrf.mxu0
  %v298 = vadd.f32 %v275, %v297
  %299 = vmatmul.f32.gmra.mxu0 %v209
  %v300 = vpop.f32.mrf.mxu0
  %v301 = vadd.f32 %v278, %v300
  %302 = vdwg.mxu0
  %303 = vmatpush.msra.mxu0 %v161
  %304 = vmatpush.msra.mxu0 %v152
  %305 = vmatpush.msra.mxu0 %v143
  %306 = vmatpush.msra.mxu0 %v134
  %307 = vmatpush.msra.mxu0 %v125
  %308 = vmatpush.msra.mxu0 %v116
  %309 = vmatpush.msra.mxu0 %v107
  %310 = vmatpush.msra.mxu0 %v98
  %311 = vmatpush.msra.mxu0 %v89
  %312 = vmatpush.msra.mxu0 %v80
  %313 = vmatpush.msra.mxu0 %v71
  %314 = vmatpush.msra.mxu0 %v62
  %315 = vmatpush.msra.mxu0 %v53
  %316 = vmatpush.msra.mxu0 %v44
  %317 = vmatpush.msra.mxu0 %v35
  %318 = vmatpush.msra.mxu0 %v26
  %319 = vmatmul.f32.gmra.mxu0 %v20
  %v320 = vpop.f32.mrf.mxu0
  %v321 = vadd.f32 0.0, %v320
  %322 = vmatmul.f32.gmra.mxu0 %v22
  %v323 = vpop.f32.mrf.mxu0
  %v324 = vadd.f32 0.0, %v323
  %325 = vdwg.mxu0
  %326 = vmatpush.msra.mxu0 0.0
  %327 = vmatpush.msra.mxu0 0.0
  %328 = vmatpush.msra.mxu0 0.0
  %329 = vmatpush.msra.mxu0 0.0
  %330 = vmatpush.msra.mxu0 0.0
  %331 = vmatpush.msra.mxu0 0.0
  %332 = vmatpush.msra.mxu0 0.0
  %333 = vmatpush.msra.mxu0 0.0
  %334 = vmatpush.msra.mxu0 0.0
  %335 = vmatpush.msra.mxu0 0.0
  %336 = vmatpush.msra.mxu0 0.0
  %337 = vmatpush.msra.mxu0 0.0
  %338 = vmatpush.msra.mxu0 %v197
  %339 = vmatpush.msra.mxu0 %v188
  %340 = vmatpush.msra.mxu0 %v179
  %341 = vmatpush.msra.mxu0 %v170
  %342 = vmatmul.f32.gmra.mxu0 %v206
  %v343 = vpop.f32.mrf.mxu0
  %v344 = vadd.f32 %v321, %v343
  %345 = vmatmul.f32.gmra.mxu0 %v209
  %v346 = vpop.f32.mrf.mxu0
  %v347 = vadd.f32 %v324, %v346
  %348 = vdwg.mxu0
  %349 = vmatpush.msra.mxu0 %v162
  %350 = vmatpush.msra.mxu0 %v153
  %351 = vmatpush.msra.mxu0 %v144
  %352 = vmatpush.msra.mxu0 %v135
  %353 = vmatpush.msra.mxu0 %v126
  %354 = vmatpush.msra.mxu0 %v117
  %355 = vmatpush.msra.mxu0 %v108
  %356 = vmatpush.msra.mxu0 %v99
  %357 = vmatpush.msra.mxu0 %v90
  %358 = vmatpush.msra.mxu0 %v81
  %359 = vmatpush.msra.mxu0 %v72
  %360 = vmatpush.msra.mxu0 %v63
  %361 = vmatpush.msra.mxu0 %v54
  %362 = vmatpush.msra.mxu0 %v45
  %363 = vmatpush.msra.mxu0 %v36
  %364 = vmatpush.msra.mxu0 %v27
  %365 = vmatmul.f32.gmra.mxu0 %v20
  %v366 = vpop.f32.mrf.mxu0
  %v367 = vadd.f32 0.0, %v366
  %368 = vmatmul.f32.gmra.mxu0 %v22
  %v369 = vpop.f32.mrf.mxu0
  %v370 = vadd.f32 0.0, %v369
  %371 = vdwg.mxu0
  %372 = vmatpush.msra.mxu0 0.0
  %373 = vmatpush.msra.mxu0 0.0
  %374 = vmatpush.msra.mxu0 0.0
  %375 = vmatpush.msra.mxu0 0.0
  %376 = vmatpush.msra.mxu0 0.0
  %377 = vmatpush.msra.mxu0 0.0
  %378 = vmatpush.msra.mxu0 0.0
  %379 = vmatpush.msra.mxu0 0.0
  %380 = vmatpush.msra.mxu0 0.0
  %381 = vmatpush.msra.mxu0 0.0
  %382 = vmatpush.msra.mxu0 0.0
  %383 = vmatpush.msra.mxu0 0.0
  %384 = vmatpush.msra.mxu0 %v198
  %385 = vmatpush.msra.mxu0 %v189
  %386 = vmatpush.msra.mxu0 %v180
  %387 = vmatpush.msra.mxu0 %v171
  %388 = vmatmul.f32.gmra.mxu0 %v206
  %v389 = vpop.f32.mrf.mxu0
  %v390 = vadd.f32 %v367, %v389
  %391 = vmatmul.f32.gmra.mxu0 %v209
  %v392 = vpop.f32.mrf.mxu0
  %v393 = vadd.f32 %v370, %v392
  %394 = vdwg.mxu0
  %395 = vmatpush.msra.mxu0 %v163
  %396 = vmatpush.msra.mxu0 %v154
  %397 = vmatpush.msra.mxu0 %v145
  %398 = vmatpush.msra.mxu0 %v136
  %399 = vmatpush.msra.mxu0 %v127
  %400 = vmatpush.msra.mxu0 %v118
  %401 = vmatpush.msra.mxu0 %v109
  %402 = vmatpush.msra.mxu0 %v100
  %403 = vmatpush.msra.mxu0 %v91
  %404 = vmatpush.msra.mxu0 %v82
  %405 = vmatpush.msra.mxu0 %v73
  %406 = vmatpush.msra.mxu0 %v64
  %407 = vmatpush.msra.mxu0 %v55
  %408 = vmatpush.msra.mxu0 %v46
  %409 = vmatpush.msra.mxu0 %v37
  %410 = vmatpush.msra.mxu0 %v28
  %411 = vmatmul.f32.gmra.mxu0 %v20
  %v412 = vpop.f32.mrf.mxu0
  %v413 = vadd.f32 0.0, %v412
  %414 = vmatmul.f32.gmra.mxu0 %v22
  %v415 = vpop.f32.mrf.mxu0
  %v416 = vadd.f32 0.0, %v415
  %417 = vdwg.mxu0
  %418 = vmatpush.msra.mxu0 0.0
  %419 = vmatpush.msra.mxu0 0.0
  %420 = vmatpush.msra.mxu0 0.0
  %421 = vmatpush.msra.mxu0 0.0
  %422 = vmatpush.msra.mxu0 0.0
  %423 = vmatpush.msra.mxu0 0.0
  %424 = vmatpush.msra.mxu0 0.0
  %425 = vmatpush.msra.mxu0 0.0
  %426 = vmatpush.msra.mxu0 0.0
  %427 = vmatpush.msra.mxu0 0.0
  %428 = vmatpush.msra.mxu0 0.0
  %429 = vmatpush.msra.mxu0 0.0
  %430 = vmatpush.msra.mxu0 %v199
  %431 = vmatpush.msra.mxu0 %v190
  %432 = vmatpush.msra.mxu0 %v181
  %433 = vmatpush.msra.mxu0 %v172
  %434 = vmatmul.f32.gmra.mxu0 %v206
  %v435 = vpop.f32.mrf.mxu0
  %v436 = vadd.f32 %v413, %v435
  %437 = vmatmul.f32.gmra.mxu0 %v209
  %v438 = vpop.f32.mrf.mxu0
  %v439 = vadd.f32 %v416, %v438
  %440 = vdwg.mxu0
  %441 = vmatpush.msra.mxu0 %v164
  %442 = vmatpush.msra.mxu0 %v155
  %443 = vmatpush.msra.mxu0 %v146
  %444 = vmatpush.msra.mxu0 %v137
  %445 = vmatpush.msra.mxu0 %v128
  %446 = vmatpush.msra.mxu0 %v119
  %447 = vmatpush.msra.mxu0 %v110
  %448 = vmatpush.msra.mxu0 %v101
  %449 = vmatpush.msra.mxu0 %v92
  %450 = vmatpush.msra.mxu0 %v83
  %451 = vmatpush.msra.mxu0 %v74
  %452 = vmatpush.msra.mxu0 %v65
  %453 = vmatpush.msra.mxu0 %v56
  %454 = vmatpush.msra.mxu0 %v47
  %455 = vmatpush.msra.mxu0 %v38
  %456 = vmatpush.msra.mxu0 %v29
  %457 = vmatmul.f32.gmra.mxu0 %v20
  %v458 = vpop.f32.mrf.mxu0
  %v459 = vadd.f32 0.0, %v458
  %460 = vmatmul.f32.gmra.mxu0 %v22
  %v461 = vpop.f32.mrf.mxu0
  %v462 = vadd.f32 0.0, %v461
  %463 = vdwg.mxu0
  %464 = vmatpush.msra.mxu0 0.0
  %465 = vmatpush.msra.mxu0 0.0
  %466 = vmatpush.msra.mxu0 0.0
  %467 = vmatpush.msra.mxu0 0.0
  %468 = vmatpush.msra.mxu0 0.0
  %469 = vmatpush.msra.mxu0 0.0
  %470 = vmatpush.msra.mxu0 0.0
  %471 = vmatpush.msra.mxu0 0.0
  %472 = vmatpush.msra.mxu0 0.0
  %473 = vmatpush.msra.mxu0 0.0
  %474 = vmatpush.msra.mxu0 0.0
  %475 = vmatpush.msra.mxu0 0.0
  %476 = vmatpush.msra.mxu0 %v200
  %477 = vmatpush.msra.mxu0 %v191
  %478 = vmatpush.msra.mxu0 %v182
  %479 = vmatpush.msra.mxu0 %v173
  %480 = vmatmul.f32.gmra.mxu0 %v206
  %v481 = vpop.f32.mrf.mxu0
  %v482 = vadd.f32 %v459, %v481
  %483 = vmatmul.f32.gmra.mxu0 %v209
  %v484 = vpop.f32.mrf.mxu0
  %v485 = vadd.f32 %v462, %v484
  %486 = vdwg.mxu0
  %487 = vmatpush.msra.mxu0 %v165
  %488 = vmatpush.msra.mxu0 %v156
  %489 = vmatpush.msra.mxu0 %v147
  %490 = vmatpush.msra.mxu0 %v138
  %491 = vmatpush.msra.mxu0 %v129
  %492 = vmatpush.msra.mxu0 %v120
  %493 = vmatpush.msra.mxu0 %v111
  %494 = vmatpush.msra.mxu0 %v102
  %495 = vmatpush.msra.mxu0 %v93
  %496 = vmatpush.msra.mxu0 %v84
  %497 = vmatpush.msra.mxu0 %v75
  %498 = vmatpush.msra.mxu0 %v66
  %499 = vmatpush.msra.mxu0 %v57
  %500 = vmatpush.msra.mxu0 %v48
  %501 = vmatpush.msra.mxu0 %v39
  %502 = vmatpush.msra.mxu0 %v30
  %503 = vmatmul.f32.gmra.mxu0 %v20
  %v504 = vpop.f32.mrf.mxu0
  %v505 = vadd.f32 0.0, %v504
  %506 = vmatmul.f32.gmra.mxu0 %v22
  %v507 = vpop.f32.mrf.mxu0
  %v508 = vadd.f32 0.0, %v507
  %509 = vdwg.mxu0
  %510 = vmatpush.msra.mxu0 0.0
  %511 = vmatpush.msra.mxu0 0.0
  %512 = vmatpush.msra.mxu0 0.0
  %513 = vmatpush.msra.mxu0 0.0
  %514 = vmatpush.msra.mxu0 0.0
  %515 = vmatpush.msra.mxu0 0.0
  %516 = vmatpush.msra.mxu0 0.0
  %517 = vmatpush.msra.mxu0 0.0
  %518 = vmatpush.msra.mxu0 0.0
  %519 = vmatpush.msra.mxu0 0.0
  %520 = vmatpush.msra.mxu0 0.0
  %521 = vmatpush.msra.mxu0 0.0
  %522 = vmatpush.msra.mxu0 %v201
  %523 = vmatpush.msra.mxu0 %v192
  %524 = vmatpush.msra.mxu0 %v183
  %525 = vmatpush.msra.mxu0 %v174
  %526 = vmatmul.f32.gmra.mxu0 %v206
  %v527 = vpop.f32.mrf.mxu0
  %v528 = vadd.f32 %v505, %v527
  %529 = vmatmul.f32.gmra.mxu0 %v209
  %v530 = vpop.f32.mrf.mxu0
  %v531 = vadd.f32 %v508, %v530
  %532 = vdwg.mxu0
  %533 = vmatpush.msra.mxu0 %v166
  %534 = vmatpush.msra.mxu0 %v157
  %535 = vmatpush.msra.mxu0 %v148
  %536 = vmatpush.msra.mxu0 %v139
  %537 = vmatpush.msra.mxu0 %v130
  %538 = vmatpush.msra.mxu0 %v121
  %539 = vmatpush.msra.mxu0 %v112
  %540 = vmatpush.msra.mxu0 %v103
  %541 = vmatpush.msra.mxu0 %v94
  %542 = vmatpush.msra.mxu0 %v85
  %543 = vmatpush.msra.mxu0 %v76
  %544 = vmatpush.msra.mxu0 %v67
  %545 = vmatpush.msra.mxu0 %v58
  %546 = vmatpush.msra.mxu0 %v49
  %547 = vmatpush.msra.mxu0 %v40
  %548 = vmatpush.msra.mxu0 %v31
  %549 = vmatmul.f32.gmra.mxu0 %v20
  %v550 = vpop.f32.mrf.mxu0
  %v551 = vadd.f32 0.0, %v550
  %552 = vmatmul.f32.gmra.mxu0 %v22
  %v553 = vpop.f32.mrf.mxu0
  %v554 = vadd.f32 0.0, %v553
  %555 = vdwg.mxu0
  %556 = vmatpush.msra.mxu0 0.0
  %557 = vmatpush.msra.mxu0 0.0
  %558 = vmatpush.msra.mxu0 0.0
  %559 = vmatpush.msra.mxu0 0.0
  %560 = vmatpush.msra.mxu0 0.0
  %561 = vmatpush.msra.mxu0 0.0
  %562 = vmatpush.msra.mxu0 0.0
  %563 = vmatpush.msra.mxu0 0.0
  %564 = vmatpush.msra.mxu0 0.0
  %565 = vmatpush.msra.mxu0 0.0
  %566 = vmatpush.msra.mxu0 0.0
  %567 = vmatpush.msra.mxu0 0.0
  %568 = vmatpush.msra.mxu0 %v202
  %569 = vmatpush.msra.mxu0 %v193
  %570 = vmatpush.msra.mxu0 %v184
  %571 = vmatpush.msra.mxu0 %v175
  %572 = vmatmul.f32.gmra.mxu0 %v206
  %v573 = vpop.f32.mrf.mxu0
  %v574 = vadd.f32 %v551, %v573
  %575 = vmatmul.f32.gmra.mxu0 %v209
  %v576 = vpop.f32.mrf.mxu0
  %v577 = vadd.f32 %v554, %v576
  %578 = vdwg.mxu0
  %579 = vmatpush.msra.mxu0 %v167
  %580 = vmatpush.msra.mxu0 %v158
  %581 = vmatpush.msra.mxu0 %v149
  %582 = vmatpush.msra.mxu0 %v140
  %583 = vmatpush.msra.mxu0 %v131
  %584 = vmatpush.msra.mxu0 %v122
  %585 = vmatpush.msra.mxu0 %v113
  %586 = vmatpush.msra.mxu0 %v104
  %587 = vmatpush.msra.mxu0 %v95
  %588 = vmatpush.msra.mxu0 %v86
  %589 = vmatpush.msra.mxu0 %v77
  %590 = vmatpush.msra.mxu0 %v68
  %591 = vmatpush.msra.mxu0 %v59
  %592 = vmatpush.msra.mxu0 %v50
  %593 = vmatpush.msra.mxu0 %v41
  %594 = vmatpush.msra.mxu0 %v32
  %595 = vmatmul.f32.gmra.mxu0 %v20
  %v596 = vpop.f32.mrf.mxu0
  %v597 = vadd.f32 0.0, %v596
  %598 = vmatmul.f32.gmra.mxu0 %v22
  %v599 = vpop.f32.mrf.mxu0
  %v600 = vadd.f32 0.0, %v599
  %601 = vdwg.mxu0
  %602 = vmatpush.msra.mxu0 0.0
  %603 = vmatpush.msra.mxu0 0.0
  %604 = vmatpush.msra.mxu0 0.0
  %605 = vmatpush.msra.mxu0 0.0
  %606 = vmatpush.msra.mxu0 0.0
  %607 = vmatpush.msra.mxu0 0.0
  %608 = vmatpush.msra.mxu0 0.0
  %609 = vmatpush.msra.mxu0 0.0
  %610 = vmatpush.msra.mxu0 0.0
  %611 = vmatpush.msra.mxu0 0.0
  %612 = vmatpush.msra.mxu0 0.0
  %613 = vmatpush.msra.mxu0 0.0
  %614 = vmatpush.msra.mxu0 %v203
  %615 = vmatpush.msra.mxu0 %v194
  %616 = vmatpush.msra.mxu0 %v185
  %617 = vmatpush.msra.mxu0 %v176
  %618 = vmatmul.f32.gmra.mxu0 %v206
  %v619 = vpop.f32.mrf.mxu0
  %v620 = vadd.f32 %v597, %v619
  %621 = vmatmul.f32.gmra.mxu0 %v209
  %v622 = vpop.f32.mrf.mxu0
  %v623 = vadd.f32 %v600, %v622
  %624 = vdwg.mxu0
  %v625 = vmax.f32 %v252, %v298
  %v626 = vmax.f32 %v255, %v301
  %v627 = vmax.f32 %v625, %v344
  %v628 = vmax.f32 %v626, %v347
  %v629 = vmax.f32 %v627, %v390
  %v630 = vmax.f32 %v628, %v393
  %v631 = vmax.f32 %v629, %v436
  %v632 = vmax.f32 %v630, %v439
  %v633 = vmax.f32 %v631, %v482
  %v634 = vmax.f32 %v632, %v485
  %v635 = vmax.f32 %v633, %v528
  %v636 = vmax.f32 %v634, %v531
  %v637 = vmax.f32 %v635, %v574
  %v638 = vmax.f32 %v636, %v577
  %v639 = vmax.f32 %v637, %v620
  %v640 = vmax.f32 %v638, %v623
  %v641 = vld [vmem:[%s2] sm:$0x1]
  %v643 = vperm.slane %v641, 0
  %v645 = vadd.f32 %v639, %v643
  %v646 = vadd.f32 %v640, %v643
  %v647 = vtanh.pop %v645
  %v648 = vtanh.pop %v646
  %v649 = vld [vmem:[%s3] sm:$0xff]
  %v650 = vld [vmem:[%s3 + $0x8] sm:$0xff]
  %v651 = vld [vmem:[%s3 + $0x10] sm:$0xff]
  %v652 = vld [vmem:[%s3 + $0x18] sm:$0xff]
  %v653 = vld [vmem:[%s3 + $0x20] sm:$0xff]
  %v654 = vld [vmem:[%s3 + $0x28] sm:$0xff]
  %v655 = vld [vmem:[%s3 + $0x30] sm:$0xff]
  %v656 = vld [vmem:[%s3 + $0x38] sm:$0xff]
  %v657 = vld [vmem:[%s3 + $0x40] sm:$0xff]
  %v658 = vld [vmem:[%s3 + $0x48] sm:$0xff]
  %v659 = vld [vmem:[%s3 + $0x50] sm:$0xff]
  %v660 = vld [vmem:[%s3 + $0x58] sm:$0xff]
  %v661 = vld [vmem:[%s3 + $0x60] sm:$0xff]
  %v662 = vld [vmem:[%s3 + $0x68] sm:$0xff]
  %v663 = vld [vmem:[%s3 + $0x70] sm:$0xff]
  %v664 = vld [vmem:[%s3 + $0x78] sm:$0xff]
  %v665 = vld [vmem:[%s3 + $0x80] sm:$0xff]
  %v666 = vld [vmem:[%s3 + $0x88] sm:$0xff]
  %v667 = vld [vmem:[%s3 + $0x90] sm:$0xff]
  %v668 = vld [vmem:[%s3 + $0x98] sm:$0xff]
  %v669 = vld [vmem:[%s3 + $0xa0] sm:$0xff]
  %v670 = vld [vmem:[%s3 + $0xa8] sm:$0xff]
  %v671 = vld [vmem:[%s3 + $0xb0] sm:$0xff]
  %v672 = vld [vmem:[%s3 + $0xb8] sm:$0xff]
  %v673 = vld [vmem:[%s3 + $0xc0] sm:$0xff]
  %v674 = vld [vmem:[%s3 + $0xc8] sm:$0xff]
  %v675 = vld [vmem:[%s3 + $0xd0] sm:$0xff]
  %v676 = vld [vmem:[%s3 + $0xd8] sm:$0xff]
  %v677 = vld [vmem:[%s3 + $0xe0] sm:$0xff]
  %v678 = vld [vmem:[%s3 + $0xe8] sm:$0xff]
  %v679 = vld [vmem:[%s3 + $0xf0] sm:$0xff]
  %v680 = vld [vmem:[%s3 + $0xf8] sm:$0xff]
  %v681 = vld [vmem:[%s4] sm:$0x3]
  %v683 = vperm.slane %v681, 0
  %v684 = vperm.slane %v681, 1
  %687 = vmatpush.msra.mxu0 %v679
  %688 = vmatpush.msra.mxu0 %v677
  %689 = vmatpush.msra.mxu0 %v675
  %690 = vmatpush.msra.mxu0 %v673
  %691 = vmatpush.msra.mxu0 %v671
  %692 = vmatpush.msra.mxu0 %v669
  %693 = vmatpush.msra.mxu0 %v667
  %694 = vmatpush.msra.mxu0 %v665
  %695 = vmatpush.msra.mxu0 %v663
  %696 = vmatpush.msra.mxu0 %v661
  %697 = vmatpush.msra.mxu0 %v659
  %698 = vmatpush.msra.mxu0 %v657
  %699 = vmatpush.msra.mxu0 %v655
  %700 = vmatpush.msra.mxu0 %v653
  %701 = vmatpush.msra.mxu0 %v651
  %702 = vmatpush.msra.mxu0 %v649
  %703 = vmatmul.f32.gmra.mxu0 %v647
  %v704 = vpop.f32.mrf.mxu0
  %v705 = vadd.f32 %v683, %v704
  %706 = vmatmul.f32.gmra.mxu0 %v648
  %v707 = vpop.f32.mrf.mxu0
  %v708 = vadd.f32 %v683, %v707
  %709 = vdwg.mxu0
  %710 = vmatpush.msra.mxu0 %v680
  %711 = vmatpush.msra.mxu0 %v678
  %712 = vmatpush.msra.mxu0 %v676
  %713 = vmatpush.msra.mxu0 %v674
  %714 = vmatpush.msra.mxu0 %v672
  %715 = vmatpush.msra.mxu0 %v670
  %716 = vmatpush.msra.mxu0 %v668
  %717 = vmatpush.msra.mxu0 %v666
  %718 = vmatpush.msra.mxu0 %v664
  %719 = vmatpush.msra.mxu0 %v662
  %720 = vmatpush.msra.mxu0 %v660
  %721 = vmatpush.msra.mxu0 %v658
  %722 = vmatpush.msra.mxu0 %v656
  %723 = vmatpush.msra.mxu0 %v654
  %724 = vmatpush.msra.mxu0 %v652
  %725 = vmatpush.msra.mxu0 %v650
  %726 = vmatmul.f32.gmra.mxu0 %v647
  %v727 = vpop.f32.mrf.mxu0
  %v728 = vadd.f32 %v684, %v727
  %729 = vmatmul.f32.gmra.mxu0 %v648
  %v730 = vpop.f32.mrf.mxu0
  %v731 = vadd.f32 %v684, %v730
  %732 = vdwg.mxu0
  %v733 = vmax.f32 %v705, 0.0
  %v734 = vmax.f32 %v708, 0.0
  %v735 = vxor.u32 %v728, 2147483648
  %v736 = vxor.u32 %v731, 2147483648
  %v737 = vmul.f32 %v735, 1.442695
  %v738 = vpow.pop %v737
  %v739 = vmul.f32 %v736, 1.442695
  %v740 = vpow.pop %v739
  %v741 = vadd.f32 %v738, 1.0
  %v742 = vadd.f32 %v740, 1.0
  %v743 = vrcp.pop %v741
  %v744 = vmul.f32 %v741, %v743
  %v745 = vsub.f32 1.0, %v744
  %v746 = vmul.f32 %v743, %v745
  %v747 = vadd.f32 %v743, %v746
  %vm748 = vweird.f32 %v741
  %vm749 = vweird.f32 %v743
  %vm750 = vmor %vm748, %vm749
  %v751 = vsel %vm750, %v743, %v747
  %v752 = vand.u32 2147483647, %v741
  %vm753 = vcmp.eq.f32.partialorder %v752, 8.507059e+37
  %v754 = vand.u32 %v741, 2147483648
  %v755 = vor.u32 1.1754944e-38, %v754
  %v756 = vsel %vm753, %v755, %v751
  %v757 = vmul.f32 1.0, %v756
  %v758 = vrcp.pop %v742
  %v759 = vmul.f32 %v742, %v758
  %v760 = vsub.f32 1.0, %v759
  %v761 = vmul.f32 %v758, %v760
  %v762 = vadd.f32 %v758, %v761
  %vm763 = vweird.f32 %v742
  %vm764 = vweird.f32 %v758
  %vm765 = vmor %vm763, %vm764
  %v766 = vsel %vm765, %v758, %v762
  %v767 = vand.u32 2147483647, %v742
  %vm768 = vcmp.eq.f32.partialorder %v767, 8.507059e+37
  %v769 = vand.u32 %v742, 2147483648
  %v770 = vor.u32 1.1754944e-38, %v769
  %v771 = vsel %vm768, %v770, %v766
  %v772 = vmul.f32 1.0, %v771
  %v773 = vmul.f32 %v757, %v733
  %v774 = vmul.f32 %v772, %v734
  %v775 = vsub.f32 1.0, %v757
  %v776 = vsub.f32 1.0, %v772
  %v777 = vmul.f32 %v775, %v647
  %v778 = vmul.f32 %v776, %v648
  %v779 = vadd.f32 %v773, %v777
  %v780 = vadd.f32 %v774, %v778
  %781 = vst [vmem:[%s5] sm:$0xff] %v779
  %782 = vst [vmem:[%s5 + $0x8] sm:$0xff] %v780
  // Predicated region
  $region22: #{char_nlm_forward.3} parent=0 // pred_check
    _
  $region23: #{char_nlm_forward.3} parent=0 // pred_check_branch
    %784 = sbr.rel (0) target = $region25
  $region24: #{char_nlm_forward.3} parent=0 // pred_region
    _
  $region25: #{char_nlm_forward.3} parent=0 // pred_fallthru
    _
  // Predicated region
  $region26: #{char_nlm_forward.3} parent=0 // pred_check
    _
  $region27: #{char_nlm_forward.3} parent=0 // pred_check_branch
    %786 = sbr.rel (0) target = $region29
  $region28: #{char_nlm_forward.3} parent=0 // pred_region
    _
  $region29: #{char_nlm_forward.3} parent=0 // pred_fallthru
    _

// kernel: char_nlm_forward.4
$region0: #{char_nlm_forward.4}
  #allocation0 [shape = 'u32[]', space=smem, size = 0x4, offset = 0x4, fixed_abs, tag = 'smem constant byte address 0x4 - core index']
  #allocation1 [shape = 'u32[72,128]{1,0:T(1,128)}', space=vmem, size = 0x9000, scoped, tag = 'internal scratch']
  #allocation2 [shape = 'f32[64,512]{1,0:T(8,128)}', space=vmem, size = 0x20000, scoped, tag = 'scratch operand']
  #allocation3 [shape = 'f32[64,128]{1,0:T(8,128)}', space=vmem, size = 0x8000, scoped, tag = 'scratch operand']
  %s0 = inlined_call_operand.vmem [shape: f32[64,128], index: 0, kind: input, shape index: {}]
  %s1 = inlined_call_operand.vmem [shape: f32[2,8,128], index: 1, kind: input, shape index: {}]
  %s2 = inlined_call_operand.vmem [shape: f32[2,8,128], index: 2, kind: input, shape index: {}]
  %s3 = inlined_call_operand.vmem [shape: f32[128,512], index: 3, kind: input, shape index: {}]
  %s4 = inlined_call_operand.vmem [shape: f32[128,512], index: 4, kind: input, shape index: {}]
  %s5 = inlined_call_operand.vmem [shape: f32[1,512], index: 5, kind: input, shape index: {}]
  %s6 = inlined_call_operand.vmem [shape: f32[128,512], index: 6, kind: input, shape index: {}]
  %s7 = inlined_call_operand.vmem [shape: f32[128,512], index: 7, kind: input, shape index: {}]
  %s8 = inlined_call_operand.vmem [shape: f32[1,512], index: 8, kind: input, shape index: {}]
  %s9 = inlined_call_operand.vmem [shape: f32[64,128], index: 9, kind: output, shape index: {0}]
  %s10 = inlined_call_operand.vmem [shape: f32[2,8,128], index: 10, kind: output, shape index: {1}]
  %s11 = inlined_call_operand.vmem [shape: f32[2,8,128], index: 11, kind: output, shape index: {2}]
  %12 = xla_tuple %s9, %s10, %s11
  %s13 = sld [smem:[#allocation0]]
  $region76: #{char_nlm_forward.4} parent=0
    _
  %s15 = ssub.s32 1, %s13
  %s16 = scalar_select 0, %s15, %s13
  // Predicated region
  $region2: #{char_nlm_forward.4} parent=0 // pred_check
    _
  $region3: #{char_nlm_forward.4} parent=0 // pred_check_branch
    %18 = sbr.rel (0) target = $region5
  $region4: #{char_nlm_forward.4} parent=0 // pred_region
    _
  $region5: #{char_nlm_forward.4} parent=0 // pred_fallthru
    _
  // Predicated region
  $region6: #{char_nlm_forward.4} parent=0 // pred_check
    _
  $region7: #{char_nlm_forward.4} parent=0 // pred_check_branch
    %20 = sbr.rel (0) target = $region9
  $region8: #{char_nlm_forward.4} parent=0 // pred_region
    _
  $region9: #{char_nlm_forward.4} parent=0 // pred_fallthru
    _
  // Predicated region
  $region10: #{char_nlm_forward.4} parent=0 // pred_check
    _
  $region11: #{char_nlm_forward.4} parent=0 // pred_check_branch
    %22 = sbr.rel (0) target = $region13
  $region12: #{char_nlm_forward.4} parent=0 // pred_region
    _
  $region13: #{char_nlm_forward.4} parent=0 // pred_fallthru
    _
  // Predicated region
  $region14: #{char_nlm_forward.4} parent=0 // pred_check
    _
  $region15: #{char_nlm_forward.4} parent=0 // pred_check_branch
    %24 = sbr.rel (0) target = $region17
  $region16: #{char_nlm_forward.4} parent=0 // pred_region
    _
  $region17: #{char_nlm_forward.4} parent=0 // pred_fallthru
    _
  // Predicated region
  $region18: #{char_nlm_forward.4} parent=0 // pred_check
    _
  $region19: #{char_nlm_forward.4} parent=0 // pred_check_branch
    %26 = sbr.rel (0) target = $region21
  $region20: #{char_nlm_forward.4} parent=0 // pred_region
    _
  $region21: #{char_nlm_forward.4} parent=0 // pred_fallthru
    _
  // Predicated region
  $region22: #{char_nlm_forward.4} parent=0 // pred_check
    _
  $region23: #{char_nlm_forward.4} parent=0 // pred_check_branch
    %28 = sbr.rel (0) target = $region25
  $region24: #{char_nlm_forward.4} parent=0 // pred_region
    _
  $region25: #{char_nlm_forward.4} parent=0 // pred_fallthru
    _
  // Predicated region
  $region26: #{char_nlm_forward.4} parent=0 // pred_check
    _
  $region27: #{char_nlm_forward.4} parent=0 // pred_check_branch
    %30 = sbr.rel (0) target = $region29
  $region28: #{char_nlm_forward.4} parent=0 // pred_region
    _
  $region29: #{char_nlm_forward.4} parent=0 // pred_fallthru
    _
  // Predicated region
  $region30: #{char_nlm_forward.4} parent=0 // pred_check
    _
  $region31: #{char_nlm_forward.4} parent=0 // pred_check_branch
    %32 = sbr.rel (0) target = $region33
  $region32: #{char_nlm_forward.4} parent=0 // pred_region
    _
  $region33: #{char_nlm_forward.4} parent=0 // pred_fallthru
    _
  // Predicated region
  $region34: #{char_nlm_forward.4} parent=0 // pred_check
    _
  $region35: #{char_nlm_forward.4} parent=0 // pred_check_branch
    %34 = sbr.rel (0) target = $region37
  $region36: #{char_nlm_forward.4} parent=0 // pred_region
    _
  $region37: #{char_nlm_forward.4} parent=0 // pred_fallthru
    _
  %v35 = vld [vmem:[%s0] sm:$0xff]
  %v36 = vld [vmem:[%s0 + $0x8] sm:$0xff]
  %v37 = vld [vmem:[%s0 + $0x10] sm:$0xff]
  %v38 = vld [vmem:[%s0 + $0x18] sm:$0xff]
  %v39 = vld [vmem:[%s0 + $0x20] sm:$0xff]
  %v40 = vld [vmem:[%s0 + $0x28] sm:$0xff]
  %v41 = vld [vmem:[%s0 + $0x30] sm:$0xff]
  %v42 = vld [vmem:[%s0 + $0x38] sm:$0xff]
  %v43 = vld [vmem:[%s3] sm:$0xff]
  %v44 = vld [vmem:[%s3 + $0x8] sm:$0xff]
  %v45 = vld [vmem:[%s3 + $0x10] sm:$0xff]
  %v46 = vld [vmem:[%s3 + $0x18] sm:$0xff]
  %v47 = vld [vmem:[%s3 + $0x20] sm:$0xff]
  %v48 = vld [vmem:[%s3 + $0x28] sm:$0xff]
  %v49 = vld [vmem:[%s3 + $0x30] sm:$0xff]
  %v50 = vld [vmem:[%s3 + $0x38] sm:$0xff]
  %v51 = vld [vmem:[%s3 + $0x40] sm:$0xff]
  %v52 = vld [vmem:[%s3 + $0x48] sm:$0xff]
  %v53 = vld [vmem:[%s3 + $0x50] sm:$0xff]
  %v54 = vld [vmem:[%s3 + $0x58] sm:$0xff]
  %v55 = vld [vmem:[%s3 + $0x60] sm:$0xff]
  %v56 = vld [vmem:[%s3 + $0x68] sm:$0xff]
  %v57 = vld [vmem:[%s3 + $0x70] sm:$0xff]
  %v58 = vld [vmem:[%s3 + $0x78] sm:$0xff]
  %v59 = vld [vmem:[%s3 + $0x80] sm:$0xff]
  %v60 = vld [vmem:[%s3 + $0x88] sm:$0xff]
  %v61 = vld [vmem:[%s3 + $0x90] sm:$0xff]
  %v62 = vld [vmem:[%s3 + $0x98] sm:$0xff]
  %v63 = vld [vmem:[%s3 + $0xa0] sm:$0xff]
  %v64 = vld [vmem:[%s3 + $0xa8] sm:$0xff]
  %v65 = vld [vmem:[%s3 + $0xb0] sm:$0xff]
  %v66 = vld [vmem:[%s3 + $0xb8] sm:$0xff]
  %v67 = vld [vmem:[%s3 + $0xc0] sm:$0xff]
  %v68 = vld [vmem:[%s3 + $0xc8] sm:$0xff]
  %v69 = vld [vmem:[%s3 + $0xd0] sm:$0xff]
  %v70 = vld [vmem:[%s3 + $0xd8] sm:$0xff]
  %v71 = vld [vmem:[%s3 + $0xe0] sm:$0xff]
  %v72 = vld [vmem:[%s3 + $0xe8] sm:$0xff]
  %v73 = vld [vmem:[%s3 + $0xf0] sm:$0xff]
  %v74 = vld [vmem:[%s3 + $0xf8] sm:$0xff]
  %v75 = vld [vmem:[%s3 + $0x100] sm:$0xff]
  %v76 = vld [vmem:[%s3 + $0x108] sm:$0xff]
  %v77 = vld [vmem:[%s3 + $0x110] sm:$0xff]
  %v78 = vld [vmem:[%s3 + $0x118] sm:$0xff]
  %v79 = vld [vmem:[%s3 + $0x120] sm:$0xff]
  %v80 = vld [vmem:[%s3 + $0x128] sm:$0xff]
  %v81 = vld [vmem:[%s3 + $0x130] sm:$0xff]
  %v82 = vld [vmem:[%s3 + $0x138] sm:$0xff]
  %v83 = vld [vmem:[%s3 + $0x140] sm:$0xff]
  %v84 = vld [vmem:[%s3 + $0x148] sm:$0xff]
  %v85 = vld [vmem:[%s3 + $0x150] sm:$0xff]
  %v86 = vld [vmem:[%s3 + $0x158] sm:$0xff]
  %v87 = vld [vmem:[%s3 + $0x160] sm:$0xff]
  %v88 = vld [vmem:[%s3 + $0x168] sm:$0xff]
  %v89 = vld [vmem:[%s3 + $0x170] sm:$0xff]
  %v90 = vld [vmem:[%s3 + $0x178] sm:$0xff]
  %v91 = vld [vmem:[%s3 + $0x180] sm:$0xff]
  %v92 = vld [vmem:[%s3 + $0x188] sm:$0xff]
  %v93 = vld [vmem:[%s3 + $0x190] sm:$0xff]
  %v94 = vld [vmem:[%s3 + $0x198] sm:$0xff]
  %v95 = vld [vmem:[%s3 + $0x1a0] sm:$0xff]
  %v96 = vld [vmem:[%s3 + $0x1a8] sm:$0xff]
  %v97 = vld [vmem:[%s3 + $0x1b0] sm:$0xff]
  %v98 = vld [vmem:[%s3 + $0x1b8] sm:$0xff]
  %v99 = vld [vmem:[%s3 + $0x1c0] sm:$0xff]
  %v100 = vld [vmem:[%s3 + $0x1c8] sm:$0xff]
  %v101 = vld [vmem:[%s3 + $0x1d0] sm:$0xff]
  %v102 = vld [vmem:[%s3 + $0x1d8] sm:$0xff]
  %v103 = vld [vmem:[%s3 + $0x1e0] sm:$0xff]
  %v104 = vld [vmem:[%s3 + $0x1e8] sm:$0xff]
  %v105 = vld [vmem:[%s3 + $0x1f0] sm:$0xff]
  %v106 = vld [vmem:[%s3 + $0x1f8] sm:$0xff]
  %v107 = vld [vmem:[%s5] sm:$0xf]
  %v109 = vperm.slane %v107, 0
  %v110 = vperm.slane %v107, 1
  %v111 = vperm.slane %v107, 2
  %v112 = vperm.slane %v107, 3
  %117 = vmatpush.msra.mxu0 %v103
  %118 = vmatpush.msra.mxu0 %v99
  %119 = vmatpush.msra.mxu0 %v95
  %120 = vmatpush.msra.mxu0 %v91
  %121 = vmatpush.msra.mxu0 %v87
  %122 = vmatpush.msra.mxu0 %v83
  %123 = vmatpush.msra.mxu0 %v79
  %124 = vmatpush.msra.mxu0 %v75
  %125 = vmatpush.msra.mxu0 %v71
  %126 = vmatpush.msra.mxu0 %v67
  %127 = vmatpush.msra.mxu0 %v63
  %128 = vmatpush.msra.mxu0 %v59
  %129 = vmatpush.msra.mxu0 %v55
  %130 = vmatpush.msra.mxu0 %v51
  %131 = vmatpush.msra.mxu0 %v47
  %132 = vmatpush.msra.mxu0 %v43
  %133 = vmatmul.f32.gmra.mxu0 %v35
  %v134 = vpop.f32.mrf.mxu0
  %v135 = vadd.f32 %v109, %v134
  %136 = vmatmul.f32.gmra.mxu0 %v36
  %v137 = vpop.f32.mrf.mxu0
  %v138 = vadd.f32 %v109, %v137
  %139 = vmatmul.f32.gmra.mxu0 %v37
  %v140 = vpop.f32.mrf.mxu0
  %v141 = vadd.f32 %v109, %v140
  %142 = vmatmul.f32.gmra.mxu0 %v38
  %v143 = vpop.f32.mrf.mxu0
  %v144 = vadd.f32 %v109, %v143
  %145 = vmatmul.f32.gmra.mxu0 %v39
  %v146 = vpop.f32.mrf.mxu0
  %v147 = vadd.f32 %v109, %v146
  %148 = vmatmul.f32.gmra.mxu0 %v40
  %v149 = vpop.f32.mrf.mxu0
  %v150 = vadd.f32 %v109, %v149
  %151 = vmatmul.f32.gmra.mxu0 %v41
  %v152 = vpop.f32.mrf.mxu0
  %v153 = vadd.f32 %v109, %v152
  %154 = vmatmul.f32.gmra.mxu0 %v42
  %v155 = vpop.f32.mrf.mxu0
  %v156 = vadd.f32 %v109, %v155
  %157 = vdwg.mxu0
  %158 = vmatpush.msra.mxu0 %v104
  %159 = vmatpush.msra.mxu0 %v100
  %160 = vmatpush.msra.mxu0 %v96
  %161 = vmatpush.msra.mxu0 %v92
  %162 = vmatpush.msra.mxu0 %v88
  %163 = vmatpush.msra.mxu0 %v84
  %164 = vmatpush.msra.mxu0 %v80
  %165 = vmatpush.msra.mxu0 %v76
  %166 = vmatpush.msra.mxu0 %v72
  %167 = vmatpush.msra.mxu0 %v68
  %168 = vmatpush.msra.mxu0 %v64
  %169 = vmatpush.msra.mxu0 %v60
  %170 = vmatpush.msra.mxu0 %v56
  %171 = vmatpush.msra.mxu0 %v52
  %172 = vmatpush.msra.mxu0 %v48
  %173 = vmatpush.msra.mxu0 %v44
  %174 = vmatmul.f32.gmra.mxu0 %v35
  %v175 = vpop.f32.mrf.mxu0
  %v176 = vadd.f32 %v110, %v175
  %177 = vmatmul.f32.gmra.mxu0 %v36
  %v178 = vpop.f32.mrf.mxu0
  %v179 = vadd.f32 %v110, %v178
  %180 = vmatmul.f32.gmra.mxu0 %v37
  %v181 = vpop.f32.mrf.mxu0
  %v182 = vadd.f32 %v110, %v181
  %183 = vmatmul.f32.gmra.mxu0 %v38
  %v184 = vpop.f32.mrf.mxu0
  %v185 = vadd.f32 %v110, %v184
  %186 = vmatmul.f32.gmra.mxu0 %v39
  %v187 = vpop.f32.mrf.mxu0
  %v188 = vadd.f32 %v110, %v187
  %189 = vmatmul.f32.gmra.mxu0 %v40
  %v190 = vpop.f32.mrf.mxu0
  %v191 = vadd.f32 %v110, %v190
  %192 = vmatmul.f32.gmra.mxu0 %v41
  %v193 = vpop.f32.mrf.mxu0
  %v194 = vadd.f32 %v110, %v193
  %195 = vmatmul.f32.gmra.mxu0 %v42
  %v196 = vpop.f32.mrf.mxu0
  %v197 = vadd.f32 %v110, %v196
  %198 = vdwg.mxu0
  %199 = vmatpush.msra.mxu0 %v105
  %200 = vmatpush.msra.mxu0 %v101
  %201 = vmatpush.msra.mxu0 %v97
  %202 = vmatpush.msra.mxu0 %v93
  %203 = vmatpush.msra.mxu0 %v89
  %204 = vmatpush.msra.mxu0 %v85
  %205 = vmatpush.msra.mxu0 %v81
  %206 = vmatpush.msra.mxu0 %v77
  %207 = vmatpush.msra.mxu0 %v73
  %208 = vmatpush.msra.mxu0 %v69
  %209 = vmatpush.msra.mxu0 %v65
  %210 = vmatpush.msra.mxu0 %v61
  %211 = vmatpush.msra.mxu0 %v57
  %212 = vmatpush.msra.mxu0 %v53
  %213 = vmatpush.msra.mxu0 %v49
  %214 = vmatpush.msra.mxu0 %v45
  %215 = vmatmul.f32.gmra.mxu0 %v35
  %v216 = vpop.f32.mrf.mxu0
  %v217 = vadd.f32 %v111, %v216
  %218 = vmatmul.f32.gmra.mxu0 %v36
  %v219 = vpop.f32.mrf.mxu0
  %v220 = vadd.f32 %v111, %v219
  %221 = vmatmul.f32.gmra.mxu0 %v37
  %v222 = vpop.f32.mrf.mxu0
  %v223 = vadd.f32 %v111, %v222
  %224 = vmatmul.f32.gmra.mxu0 %v38
  %v225 = vpop.f32.mrf.mxu0
  %v226 = vadd.f32 %v111, %v225
  %227 = vmatmul.f32.gmra.mxu0 %v39
  %v228 = vpop.f32.mrf.mxu0
  %v229 = vadd.f32 %v111, %v228
  %230 = vmatmul.f32.gmra.mxu0 %v40
  %v231 = vpop.f32.mrf.mxu0
  %v232 = vadd.f32 %v111, %v231
  %233 = vmatmul.f32.gmra.mxu0 %v41
  %v234 = vpop.f32.mrf.mxu0
  %v235 = vadd.f32 %v111, %v234
  %236 = vmatmul.f32.gmra.mxu0 %v42
  %v237 = vpop.f32.mrf.mxu0
  %v238 = vadd.f32 %v111, %v237
  %239 = vdwg.mxu0
  %240 = vmatpush.msra.mxu0 %v106
  %241 = vmatpush.msra.mxu0 %v102
  %242 = vmatpush.msra.mxu0 %v98
  %243 = vmatpush.msra.mxu0 %v94
  %244 = vmatpush.msra.mxu0 %v90
  %245 = vmatpush.msra.mxu0 %v86
  %246 = vmatpush.msra.mxu0 %v82
  %247 = vmatpush.msra.mxu0 %v78
  %248 = vmatpush.msra.mxu0 %v74
  %249 = vmatpush.msra.mxu0 %v70
  %250 = vmatpush.msra.mxu0 %v66
  %251 = vmatpush.msra.mxu0 %v62
  %252 = vmatpush.msra.mxu0 %v58
  %253 = vmatpush.msra.mxu0 %v54
  %254 = vmatpush.msra.mxu0 %v50
  %255 = vmatpush.msra.mxu0 %v46
  %256 = vmatmul.f32.gmra.mxu0 %v35
  %v257 = vpop.f32.mrf.mxu0
  %v258 = vadd.f32 %v112, %v257
  %259 = vmatmul.f32.gmra.mxu0 %v36
  %v260 = vpop.f32.mrf.mxu0
  %v261 = vadd.f32 %v112, %v260
  %262 = vmatmul.f32.gmra.mxu0 %v37
  %v263 = vpop.f32.mrf.mxu0
  %v264 = vadd.f32 %v112, %v263
  %265 = vmatmul.f32.gmra.mxu0 %v38
  %v266 = vpop.f32.mrf.mxu0
  %v267 = vadd.f32 %v112, %v266
  %268 = vmatmul.f32.gmra.mxu0 %v39
  %v269 = vpop.f32.mrf.mxu0
  %v270 = vadd.f32 %v112, %v269
  %271 = vmatmul.f32.gmra.mxu0 %v40
  %v272 = vpop.f32.mrf.mxu0
  %v273 = vadd.f32 %v112, %v272
  %274 = vmatmul.f32.gmra.mxu0 %v41
  %v275 = vpop.f32.mrf.mxu0
  %v276 = vadd.f32 %v112, %v275
  %277 = vmatmul.f32.gmra.mxu0 %v42
  %v278 = vpop.f32.mrf.mxu0
  %v279 = vadd.f32 %v112, %v278
  %280 = vdwg.mxu0
  %281 = vst [vmem:[#allocation2] sm:$0xff] %v135
  %282 = vst [vmem:[#allocation2 + $0x8] sm:$0xff] %v176
  %283 = vst [vmem:[#allocation2 + $0x10] sm:$0xff] %v217
  %284 = vst [vmem:[#allocation2 + $0x18] sm:$0xff] %v258
  %285 = vst [vmem:[#allocation2 + $0x20] sm:$0xff] %v138
  %286 = vst [vmem:[#allocation2 + $0x28] sm:$0xff] %v179
  %287 = vst [vmem:[#allocation2 + $0x30] sm:$0xff] %v220
  %288 = vst [vmem:[#allocation2 + $0x38] sm:$0xff] %v261
  %289 = vst [vmem:[#allocation2 + $0x40] sm:$0xff] %v141
  %290 = vst [vmem:[#allocation2 + $0x48] sm:$0xff] %v182
  %291 = vst [vmem:[#allocation2 + $0x50] sm:$0xff] %v223
  %292 = vst [vmem:[#allocation2 + $0x58] sm:$0xff] %v264
  %293 = vst [vmem:[#allocation2 + $0x60] sm:$0xff] %v144
  %294 = vst [vmem:[#allocation2 + $0x68] sm:$0xff] %v185
  %295 = vst [vmem:[#allocation2 + $0x70] sm:$0xff] %v226
  %296 = vst [vmem:[#allocation2 + $0x78] sm:$0xff] %v267
  %297 = vst [vmem:[#allocation2 + $0x80] sm:$0xff] %v147
  %298 = vst [vmem:[#allocation2 + $0x88] sm:$0xff] %v188
  %299 = vst [vmem:[#allocation2 + $0x90] sm:$0xff] %v229
  %300 = vst [vmem:[#allocation2 + $0x98] sm:$0xff] %v270
  %301 = vst [vmem:[#allocation2 + $0xa0] sm:$0xff] %v150
  %302 = vst [vmem:[#allocation2 + $0xa8] sm:$0xff] %v191
  %303 = vst [vmem:[#allocation2 + $0xb0] sm:$0xff] %v232
  %304 = vst [vmem:[#allocation2 + $0xb8] sm:$0xff] %v273
  %305 = vst [vmem:[#allocation2 + $0xc0] sm:$0xff] %v153
  %306 = vst [vmem:[#allocation2 + $0xc8] sm:$0xff] %v194
  %307 = vst [vmem:[#allocation2 + $0xd0] sm:$0xff] %v235
  %308 = vst [vmem:[#allocation2 + $0xd8] sm:$0xff] %v276
  %309 = vst [vmem:[#allocation2 + $0xe0] sm:$0xff] %v156
  %310 = vst [vmem:[#allocation2 + $0xe8] sm:$0xff] %v197
  %311 = vst [vmem:[#allocation2 + $0xf0] sm:$0xff] %v238
  %312 = vst [vmem:[#allocation2 + $0xf8] sm:$0xff] %v279
  %v313 = vld [vmem:[%s1] sm:$0xff]
  %v314 = vld [vmem:[%s2] sm:$0xff]
  loop: start=0, step=1, limit=8
  $region38: #{char_nlm_forward.4} parent=0 // loop_pre_header
    _
  $region39: #{char_nlm_forward.4} parent=0 // loop_header
    %s316 = sphi 0, %s320
    %p317 = scmp.ge.s32.totalorder %s316, 8
    %v321 = vphi %v313, %v543
    %v322 = vphi %v314, %v541
  $region40: #{char_nlm_forward.4} parent=0 // loop_header_branch
    %319 = sbr.rel (%p317) target = $region44
  $region41: #{char_nlm_forward.4} parent=0 // loop_body
    %s323 = smul.u32 %s316, 8
    %s324 = sshra.s32 %s323, 3
    %s325 = sand.u32 %s323, 7
    %s326 = smul.u32 %s324, 4
    %s327 = smul.addr %s326, 8
    %s328 = scalar_lea.vmem [#allocation2], %s327
    %v329 = vld [vmem:[%s328] sm:$0xff]
    %v330 = vld [vmem:[%s328 + $0x8] sm:$0xff]
    %v331 = vld [vmem:[%s328 + $0x10] sm:$0xff]
    %v332 = vld [vmem:[%s328 + $0x18] sm:$0xff]
    %v333 = vld [vmem:[%s4] sm:$0xff]
    %v334 = vld [vmem:[%s4 + $0x8] sm:$0xff]
    %v335 = vld [vmem:[%s4 + $0x10] sm:$0xff]
    %v336 = vld [vmem:[%s4 + $0x18] sm:$0xff]
    %v337 = vld [vmem:[%s4 + $0x20] sm:$0xff]
    %v338 = vld [vmem:[%s4 + $0x28] sm:$0xff]
    %v339 = vld [vmem:[%s4 + $0x30] sm:$0xff]
    %v340 = vld [vmem:[%s4 + $0x38] sm:$0xff]
    %v341 = vld [vmem:[%s4 + $0x40] sm:$0xff]
    %v342 = vld [vmem:[%s4 + $0x48] sm:$0xff]
    %v343 = vld [vmem:[%s4 + $0x50] sm:$0xff]
    %v344 = vld [vmem:[%s4 + $0x58] sm:$0xff]
    %v345 = vld [vmem:[%s4 + $0x60] sm:$0xff]
    %v346 = vld [vmem:[%s4 + $0x68] sm:$0xff]
    %v347 = vld [vmem:[%s4 + $0x70] sm:$0xff]
    %v348 = vld [vmem:[%s4 + $0x78] sm:$0xff]
    %v349 = vld [vmem:[%s4 + $0x80] sm:$0xff]
    %v350 = vld [vmem:[%s4 + $0x88] sm:$0xff]
    %v351 = vld [vmem:[%s4 + $0x90] sm:$0xff]
    %v352 = vld [vmem:[%s4 + $0x98] sm:$0xff]
    %v353 = vld [vmem:[%s4 + $0xa0] sm:$0xff]
    %v354 = vld [vmem:[%s4 + $0xa8] sm:$0xff]
    %v355 = vld [vmem:[%s4 + $0xb0] sm:$0xff]
    %v356 = vld [vmem:[%s4 + $0xb8] sm:$0xff]
    %v357 = vld [vmem:[%s4 + $0xc0] sm:$0xff]
    %v358 = vld [vmem:[%s4 + $0xc8] sm:$0xff]
    %v359 = vld [vmem:[%s4 + $0xd0] sm:$0xff]
    %v360 = vld [vmem:[%s4 + $0xd8] sm:$0xff]
    %v361 = vld [vmem:[%s4 + $0xe0] sm:$0xff]
    %v362 = vld [vmem:[%s4 + $0xe8] sm:$0xff]
    %v363 = vld [vmem:[%s4 + $0xf0] sm:$0xff]
    %v364 = vld [vmem:[%s4 + $0xf8] sm:$0xff]
    %v365 = vld [vmem:[%s4 + $0x100] sm:$0xff]
    %v366 = vld [vmem:[%s4 + $0x108] sm:$0xff]
    %v367 = vld [vmem:[%s4 + $0x110] sm:$0xff]
    %v368 = vld [vmem:[%s4 + $0x118] sm:$0xff]
    %v369 = vld [vmem:[%s4 + $0x120] sm:$0xff]
    %v370 = vld [vmem:[%s4 + $0x128] sm:$0xff]
    %v371 = vld [vmem:[%s4 + $0x130] sm:$0xff]
    %v372 = vld [vmem:[%s4 + $0x138] sm:$0xff]
    %v373 = vld [vmem:[%s4 + $0x140] sm:$0xff]
    %v374 = vld [vmem:[%s4 + $0x148] sm:$0xff]
    %v375 = vld [vmem:[%s4 + $0x150] sm:$0xff]
    %v376 = vld [vmem:[%s4 + $0x158] sm:$0xff]
    %v377 = vld [vmem:[%s4 + $0x160] sm:$0xff]
    %v378 = vld [vmem:[%s4 + $0x168] sm:$0xff]
    %v379 = vld [vmem:[%s4 + $0x170] sm:$0xff]
    %v380 = vld [vmem:[%s4 + $0x178] sm:$0xff]
    %v381 = vld [vmem:[%s4 + $0x180] sm:$0xff]
    %v382 = vld [vmem:[%s4 + $0x188] sm:$0xff]
    %v383 = vld [vmem:[%s4 + $0x190] sm:$0xff]
    %v384 = vld [vmem:[%s4 + $0x198] sm:$0xff]
    %v385 = vld [vmem:[%s4 + $0x1a0] sm:$0xff]
    %v386 = vld [vmem:[%s4 + $0x1a8] sm:$0xff]
    %v387 = vld [vmem:[%s4 + $0x1b0] sm:$0xff]
    %v388 = vld [vmem:[%s4 + $0x1b8] sm:$0xff]
    %v389 = vld [vmem:[%s4 + $0x1c0] sm:$0xff]
    %v390 = vld [vmem:[%s4 + $0x1c8] sm:$0xff]
    %v391 = vld [vmem:[%s4 + $0x1d0] sm:$0xff]
    %v392 = vld [vmem:[%s4 + $0x1d8] sm:$0xff]
    %v393 = vld [vmem:[%s4 + $0x1e0] sm:$0xff]
    %v394 = vld [vmem:[%s4 + $0x1e8] sm:$0xff]
    %v395 = vld [vmem:[%s4 + $0x1f0] sm:$0xff]
    %v396 = vld [vmem:[%s4 + $0x1f8] sm:$0xff]
    %397 = vmatpush.msra.mxu0 %v393
    %398 = vmatpush.msra.mxu0 %v389
    %399 = vmatpush.msra.mxu0 %v385
    %400 = vmatpush.msra.mxu0 %v381
    %401 = vmatpush.msra.mxu0 %v377
    %402 = vmatpush.msra.mxu0 %v373
    %403 = vmatpush.msra.mxu0 %v369
    %404 = vmatpush.msra.mxu0 %v365
    %405 = vmatpush.msra.mxu0 %v361
    %406 = vmatpush.msra.mxu0 %v357
    %407 = vmatpush.msra.mxu0 %v353
    %408 = vmatpush.msra.mxu0 %v349
    %409 = vmatpush.msra.mxu0 %v345
    %410 = vmatpush.msra.mxu0 %v341
    %411 = vmatpush.msra.mxu0 %v337
    %412 = vmatpush.msra.mxu0 %v333
    %413 = vmatmul.f32.gmra.mxu0 %v321
    %v414 = vpop.f32.mrf.mxu0
    %v415 = vadd.f32 0.0, %v414
    %416 = vdwg.mxu0
    %417 = vmatpush.msra.mxu0 %v394
    %418 = vmatpush.msra.mxu0 %v390
    %419 = vmatpush.msra.mxu0 %v386
    %420 = vmatpush.msra.mxu0 %v382
    %421 = vmatpush.msra.mxu0 %v378
    %422 = vmatpush.msra.mxu0 %v374
    %423 = vmatpush.msra.mxu0 %v370
    %424 = vmatpush.msra.mxu0 %v366
    %425 = vmatpush.msra.mxu0 %v362
    %426 = vmatpush.msra.mxu0 %v358
    %427 = vmatpush.msra.mxu0 %v354
    %428 = vmatpush.msra.mxu0 %v350
    %429 = vmatpush.msra.mxu0 %v346
    %430 = vmatpush.msra.mxu0 %v342
    %431 = vmatpush.msra.mxu0 %v338
    %432 = vmatpush.msra.mxu0 %v334
    %433 = vmatmul.f32.gmra.mxu0 %v321
    %v434 = vpop.f32.mrf.mxu0
    %v435 = vadd.f32 0.0, %v434
    %436 = vdwg.mxu0
    %437 = vmatpush.msra.mxu0 %v395
    %438 = vmatpush.msra.mxu0 %v391
    %439 = vmatpush.msra.mxu0 %v387
    %440 = vmatpush.msra.mxu0 %v383
    %441 = vmatpush.msra.mxu0 %v379
    %442 = vmatpush.msra.mxu0 %v375
    %443 = vmatpush.msra.mxu0 %v371
    %444 = vmatpush.msra.mxu0 %v367
    %445 = vmatpush.msra.mxu0 %v363
    %446 = vmatpush.msra.mxu0 %v359
    %447 = vmatpush.msra.mxu0 %v355
    %448 = vmatpush.msra.mxu0 %v351
    %449 = vmatpush.msra.mxu0 %v347
    %450 = vmatpush.msra.mxu0 %v343
    %451 = vmatpush.msra.mxu0 %v339
    %452 = vmatpush.msra.mxu0 %v335
    %453 = vmatmul.f32.gmra.mxu0 %v321
    %v454 = vpop.f32.mrf.mxu0
    %v455 = vadd.f32 0.0, %v454
    %456 = vdwg.mxu0
    %457 = vmatpush.msra.mxu0 %v396
    %458 = vmatpush.msra.mxu0 %v392
    %459 = vmatpush.msra.mxu0 %v388
    %460 = vmatpush.msra.mxu0 %v384
    %461 = vmatpush.msra.mxu0 %v380
    %462 = vmatpush.msra.mxu0 %v376
    %463 = vmatpush.msra.mxu0 %v372
    %464 = vmatpush.msra.mxu0 %v368
    %465 = vmatpush.msra.mxu0 %v364
    %466 = vmatpush.msra.mxu0 %v360
    %467 = vmatpush.msra.mxu0 %v356
    %468 = vmatpush.msra.mxu0 %v352
    %469 = vmatpush.msra.mxu0 %v348
    %470 = vmatpush.msra.mxu0 %v344
    %471 = vmatpush.msra.mxu0 %v340
    %472 = vmatpush.msra.mxu0 %v336
    %473 = vmatmul.f32.gmra.mxu0 %v321
    %v474 = vpop.f32.mrf.mxu0
    %v475 = vadd.f32 0.0, %v474
    %476 = vdwg.mxu0
    %v477 = vadd.f32 %v329, %v415
    %v478 = vadd.f32 %v330, %v435
    %v479 = vadd.f32 %v331, %v455
    %v480 = vadd.f32 %v332, %v475
    %v481 = vxor.u32 %v477, 2147483648
    %v482 = vmul.f32 %v481, 1.442695
    %v483 = vpow.pop %v482
    %v484 = vadd.f32 %v483, 1.0
    %v485 = vrcp.pop %v484
    %v486 = vmul.f32 %v484, %v485
    %v487 = vsub.f32 1.0, %v486
    %v488 = vmul.f32 %v485, %v487
    %v489 = vadd.f32 %v485, %v488
    %vm490 = vweird.f32 %v484
    %vm491 = vweird.f32 %v485
    %vm492 = vmor %vm490, %vm491
    %v493 = vsel %vm492, %v485, %v489
    %v494 = vand.u32 2147483647, %v484
    %vm495 = vcmp.eq.f32.partialorder %v494, 8.507059e+37
    %v496 = vand.u32 %v484, 2147483648
    %v497 = vor.u32 1.1754944e-38, %v496
    %v498 = vsel %vm495, %v497, %v493
    %v499 = vmul.f32 1.0, %v498
    %v500 = vxor.u32 %v478, 2147483648
    %v501 = vmul.f32 %v500, 1.442695
    %v502 = vpow.pop %v501
    %v503 = vadd.f32 %v502, 1.0
    %v504 = vrcp.pop %v503
    %v505 = vmul.f32 %v503, %v504
    %v506 = vsub.f32 1.0, %v505
    %v507 = vmul.f32 %v504, %v506
    %v508 = vadd.f32 %v504, %v507
    %vm509 = vweird.f32 %v503
    %vm510 = vweird.f32 %v504
    %vm511 = vmor %vm509, %vm510
    %v512 = vsel %vm511, %v504, %v508
    %v513 = vand.u32 2147483647, %v503
    %vm514 = vcmp.eq.f32.partialorder %v513, 8.507059e+37
    %v515 = vand.u32 %v503, 2147483648
    %v516 = vor.u32 1.1754944e-38, %v515
    %v517 = vsel %vm514, %v516, %v512
    %v518 = vmul.f32 1.0, %v517
    %v519 = vtanh.pop %v479
    %v520 = vxor.u32 %v480, 2147483648
    %v521 = vmul.f32 %v520, 1.442695
    %v522 = vpow.pop %v521
    %v523 = vadd.f32 %v522, 1.0
    %v524 = vrcp.pop %v523
    %v525 = vmul.f32 %v523, %v524
    %v526 = vsub.f32 1.0, %v525
    %v527 = vmul.f32 %v524, %v526
    %v528 = vadd.f32 %v524, %v527
    %vm529 = vweird.f32 %v523
    %vm530 = vweird.f32 %v524
    %vm531 = vmor %vm529, %vm530
    %v532 = vsel %vm531, %v524, %v528
    %v533 = vand.u32 2147483647, %v523
    %vm534 = vcmp.eq.f32.partialorder %v533, 8.507059e+37
    %v535 = vand.u32 %v523, 2147483648
    %v536 = vor.u32 1.1754944e-38, %v535
    %v537 = vsel %vm534, %v536, %v532
    %v538 = vmul.f32 1.0, %v537
    %v539 = vmul.f32 %v518, %v322
    %v540 = vmul.f32 %v499, %v519
    %v541 = vadd.f32 %v539, %v540
    %v542 = vtanh.pop %v541
    %v543 = vmul.f32 %v538, %v542
    %s544 = scalar_lea.vmem [#allocation3], %s323
    %545 = vst [vmem:[%s544] sm:$0xff] %v543
  $region42: #{char_nlm_forward.4} parent=0 // loop_footer
    %s320 = sadd.s32 1, %s316
  $region43: #{char_nlm_forward.4} parent=0 // loop_footer_branch
    %315 = sbr.rel target = $region39
  $region44: #{char_nlm_forward.4} parent=0 // loop_exit
    _
  %546 = vst [vmem:[%s10] sm:$0xff] %v321
  %547 = vst [vmem:[%s11] sm:$0xff] %v322
  %v548 = vld [vmem:[#allocation3] sm:$0xff]
  %v549 = vld [vmem:[#allocation3 + $0x8] sm:$0xff]
  %v550 = vld [vmem:[#allocation3 + $0x10] sm:$0xff]
  %v551 = vld [vmem:[#allocation3 + $0x18] sm:$0xff]
  %v552 = vld [vmem:[#allocation3 + $0x20] sm:$0xff]
  %v553 = vld [vmem:[#allocation3 + $0x28] sm:$0xff]
  %v554 = vld [vmem:[#allocation3 + $0x30] sm:$0xff]
  %v555 = vld [vmem:[#allocation3 + $0x38] sm:$0xff]
  %v556 = vld [vmem:[%s6] sm:$0xff]
  %v557 = vld [vmem:[%s6 + $0x8] sm:$0xff]
  %v558 = vld [vmem:[%s6 + $0x10] sm:$0xff]
  %v559 = vld [vmem:[%s6 + $0x18] sm:$0xff]
  %v560 = vld [vmem:[%s6 + $0x20] sm:$0xff]
  %v561 = vld [vmem:[%s6 + $0x28] sm:$0xff]
  %v562 = vld [vmem:[%s6 + $0x30] sm:$0xff]
  %v563 = vld [vmem:[%s6 + $0x38] sm:$0xff]
  %v564 = vld [vmem:[%s6 + $0x40] sm:$0xff]
  %v565 = vld [vmem:[%s6 + $0x48] sm:$0xff]
  %v566 = vld [vmem:[%s6 + $0x50] sm:$0xff]
  %v567 = vld [vmem:[%s6 + $0x58] sm:$0xff]
  %v568 = vld [vmem:[%s6 + $0x60] sm:$0xff]
  %v569 = vld [vmem:[%s6 + $0x68] sm:$0xff]
  %v570 = vld [vmem:[%s6 + $0x70] sm:$0xff]
  %v571 = vld [vmem:[%s6 + $0x78] sm:$0xff]
  %v572 = vld [vmem:[%s6 + $0x80] sm:$0xff]
  %v573 = vld [vmem:[%s6 + $0x88] sm:$0xff]
  %v574 = vld [vmem:[%s6 + $0x90] sm:$0xff]
  %v575 = vld [vmem:[%s6 + $0x98] sm:$0xff]
  %v576 = vld [vmem:[%s6 + $0xa0] sm:$0xff]
  %v577 = vld [vmem:[%s6 + $0xa8] sm:$0xff]
  %v578 = vld [vmem:[%s6 + $0xb0] sm:$0xff]
  %v579 = vld [vmem:[%s6 + $0xb8] sm:$0xff]
  %v580 = vld [vmem:[%s6 + $0xc0] sm:$0xff]
  %v581 = vld [vmem:[%s6 + $0xc8] sm:$0xff]
  %v582 = vld [vmem:[%s6 + $0xd0] sm:$0xff]
  %v583 = vld [vmem:[%s6 + $0xd8] sm:$0xff]
  %v584 = vld [vmem:[%s6 + $0xe0] sm:$0xff]
  %v585 = vld [vmem:[%s6 + $0xe8] sm:$0xff]
  %v586 = vld [vmem:[%s6 + $0xf0] sm:$0xff]
  %v587 = vld [vmem:[%s6 + $0xf8] sm:$0xff]
  %v588 = vld [vmem:[%s6 + $0x100] sm:$0xff]
  %v589 = vld [vmem:[%s6 + $0x108] sm:$0xff]
  %v590 = vld [vmem:[%s6 + $0x110] sm:$0xff]
  %v591 = vld [vmem:[%s6 + $0x118] sm:$0xff]
  %v592 = vld [vmem:[%s6 + $0x120] sm:$0xff]
  %v593 = vld [vmem:[%s6 + $0x128] sm:$0xff]
  %v594 = vld [vmem:[%s6 + $0x130] sm:$0xff]
  %v595 = vld [vmem:[%s6 + $0x138] sm:$0xff]
  %v596 = vld [vmem:[%s6 + $0x140] sm:$0xff]
  %v597 = vld [vmem:[%s6 + $0x148] sm:$0xff]
  %v598 = vld [vmem:[%s6 + $0x150] sm:$0xff]
  %v599 = vld [vmem:[%s6 + $0x158] sm:$0xff]
  %v600 = vld [vmem:[%s6 + $0x160] sm:$0xff]
  %v601 = vld [vmem:[%s6 + $0x168] sm:$0xff]
  %v602 = vld [vmem:[%s6 + $0x170] sm:$0xff]
  %v603 = vld [vmem:[%s6 + $0x178] sm:$0xff]
  %v604 = vld [vmem:[%s6 + $0x180] sm:$0xff]
  %v605 = vld [vmem:[%s6 + $0x188] sm:$0xff]
  %v606 = vld [vmem:[%s6 + $0x190] sm:$0xff]
  %v607 = vld [vmem:[%s6 + $0x198] sm:$0xff]
  %v608 = vld [vmem:[%s6 + $0x1a0] sm:$0xff]
  %v609 = vld [vmem:[%s6 + $0x1a8] sm:$0xff]
  %v610 = vld [vmem:[%s6 + $0x1b0] sm:$0xff]
  %v611 = vld [vmem:[%s6 + $0x1b8] sm:$0xff]
  %v612 = vld [vmem:[%s6 + $0x1c0] sm:$0xff]
  %v613 = vld [vmem:[%s6 + $0x1c8] sm:$0xff]
  %v614 = vld [vmem:[%s6 + $0x1d0] sm:$0xff]
  %v615 = vld [vmem:[%s6 + $0x1d8] sm:$0xff]
  %v616 = vld [vmem:[%s6 + $0x1e0] sm:$0xff]
  %v617 = vld [vmem:[%s6 + $0x1e8] sm:$0xff]
  %v618 = vld [vmem:[%s6 + $0x1f0] sm:$0xff]
  %v619 = vld [vmem:[%s6 + $0x1f8] sm:$0xff]
  %v620 = vld [vmem:[%s8] sm:$0xf]
  %v622 = vperm.slane %v620, 0
  %v623 = vperm.slane %v620, 1
  %v624 = vperm.slane %v620, 2
  %v625 = vperm.slane %v620, 3
  %630 = vmatpush.msra.mxu0 %v616
  %631 = vmatpush.msra.mxu0 %v612
  %632 = vmatpush.msra.mxu0 %v608
  %633 = vmatpush.msra.mxu0 %v604
  %634 = vmatpush.msra.mxu0 %v600
  %635 = vmatpush.msra.mxu0 %v596
  %636 = vmatpush.msra.mxu0 %v592
  %637 = vmatpush.msra.mxu0 %v588
  %638 = vmatpush.msra.mxu0 %v584
  %639 = vmatpush.msra.mxu0 %v580
  %640 = vmatpush.msra.mxu0 %v576
  %641 = vmatpush.msra.mxu0 %v572
  %642 = vmatpush.msra.mxu0 %v568
  %643 = vmatpush.msra.mxu0 %v564
  %644 = vmatpush.msra.mxu0 %v560
  %645 = vmatpush.msra.mxu0 %v556
  %646 = vmatmul.f32.gmra.mxu0 %v548
  %v647 = vpop.f32.mrf.mxu0
  %v648 = vadd.f32 %v622, %v647
  %649 = vmatmul.f32.gmra.mxu0 %v549
  %v650 = vpop.f32.mrf.mxu0
  %v651 = vadd.f32 %v622, %v650
  %652 = vmatmul.f32.gmra.mxu0 %v550
  %v653 = vpop.f32.mrf.mxu0
  %v654 = vadd.f32 %v622, %v653
  %655 = vmatmul.f32.gmra.mxu0 %v551
  %v656 = vpop.f32.mrf.mxu0
  %v657 = vadd.f32 %v622, %v656
  %658 = vmatmul.f32.gmra.mxu0 %v552
  %v659 = vpop.f32.mrf.mxu0
  %v660 = vadd.f32 %v622, %v659
  %661 = vmatmul.f32.gmra.mxu0 %v553
  %v662 = vpop.f32.mrf.mxu0
  %v663 = vadd.f32 %v622, %v662
  %664 = vmatmul.f32.gmra.mxu0 %v554
  %v665 = vpop.f32.mrf.mxu0
  %v666 = vadd.f32 %v622, %v665
  %667 = vmatmul.f32.gmra.mxu0 %v555
  %v668 = vpop.f32.mrf.mxu0
  %v669 = vadd.f32 %v622, %v668
  %670 = vdwg.mxu0
  %671 = vmatpush.msra.mxu0 %v617
  %672 = vmatpush.msra.mxu0 %v613
  %673 = vmatpush.msra.mxu0 %v609
  %674 = vmatpush.msra.mxu0 %v605
  %675 = vmatpush.msra.mxu0 %v601
  %676 = vmatpush.msra.mxu0 %v597
  %677 = vmatpush.msra.mxu0 %v593
  %678 = vmatpush.msra.mxu0 %v589
  %679 = vmatpush.msra.mxu0 %v585
  %680 = vmatpush.msra.mxu0 %v581
  %681 = vmatpush.msra.mxu0 %v577
  %682 = vmatpush.msra.mxu0 %v573
  %683 = vmatpush.msra.mxu0 %v569
  %684 = vmatpush.msra.mxu0 %v565
  %685 = vmatpush.msra.mxu0 %v561
  %686 = vmatpush.msra.mxu0 %v557
  %687 = vmatmul.f32.gmra.mxu0 %v548
  %v688 = vpop.f32.mrf.mxu0
  %v689 = vadd.f32 %v623, %v688
  %690 = vmatmul.f32.gmra.mxu0 %v549
  %v691 = vpop.f32.mrf.mxu0
  %v692 = vadd.f32 %v623, %v691
  %693 = vmatmul.f32.gmra.mxu0 %v550
  %v694 = vpop.f32.mrf.mxu0
  %v695 = vadd.f32 %v623, %v694
  %696 = vmatmul.f32.gmra.mxu0 %v551
  %v697 = vpop.f32.mrf.mxu0
  %v698 = vadd.f32 %v623, %v697
  %699 = vmatmul.f32.gmra.mxu0 %v552
  %v700 = vpop.f32.mrf.mxu0
  %v701 = vadd.f32 %v623, %v700
  %702 = vmatmul.f32.gmra.mxu0 %v553
  %v703 = vpop.f32.mrf.mxu0
  %v704 = vadd.f32 %v623, %v703
  %705 = vmatmul.f32.gmra.mxu0 %v554
  %v706 = vpop.f32.mrf.mxu0
  %v707 = vadd.f32 %v623, %v706
  %708 = vmatmul.f32.gmra.mxu0 %v555
  %v709 = vpop.f32.mrf.mxu0
  %v710 = vadd.f32 %v623, %v709
  %711 = vdwg.mxu0
  %712 = vmatpush.msra.mxu0 %v618
  %713 = vmatpush.msra.mxu0 %v614
  %714 = vmatpush.msra.mxu0 %v610
  %715 = vmatpush.msra.mxu0 %v606
  %716 = vmatpush.msra.mxu0 %v602
  %717 = vmatpush.msra.mxu0 %v598
  %718 = vmatpush.msra.mxu0 %v594
  %719 = vmatpush.msra.mxu0 %v590
  %720 = vmatpush.msra.mxu0 %v586
  %721 = vmatpush.msra.mxu0 %v582
  %722 = vmatpush.msra.mxu0 %v578
  %723 = vmatpush.msra.mxu0 %v574
  %724 = vmatpush.msra.mxu0 %v570
  %725 = vmatpush.msra.mxu0 %v566
  %726 = vmatpush.msra.mxu0 %v562
  %727 = vmatpush.msra.mxu0 %v558
  %728 = vmatmul.f32.gmra.mxu0 %v548
  %v729 = vpop.f32.mrf.mxu0
  %v730 = vadd.f32 %v624, %v729
  %731 = vmatmul.f32.gmra.mxu0 %v549
  %v732 = vpop.f32.mrf.mxu0
  %v733 = vadd.f32 %v624, %v732
  %734 = vmatmul.f32.gmra.mxu0 %v550
  %v735 = vpop.f32.mrf.mxu0
  %v736 = vadd.f32 %v624, %v735
  %737 = vmatmul.f32.gmra.mxu0 %v551
  %v738 = vpop.f32.mrf.mxu0
  %v739 = vadd.f32 %v624, %v738
  %740 = vmatmul.f32.gmra.mxu0 %v552
  %v741 = vpop.f32.mrf.mxu0
  %v742 = vadd.f32 %v624, %v741
  %743 = vmatmul.f32.gmra.mxu0 %v553
  %v744 = vpop.f32.mrf.mxu0
  %v745 = vadd.f32 %v624, %v744
  %746 = vmatmul.f32.gmra.mxu0 %v554
  %v747 = vpop.f32.mrf.mxu0
  %v748 = vadd.f32 %v624, %v747
  %749 = vmatmul.f32.gmra.mxu0 %v555
  %v750 = vpop.f32.mrf.mxu0
  %v751 = vadd.f32 %v624, %v750
  %752 = vdwg.mxu0
  %753 = vmatpush.msra.mxu0 %v619
  %754 = vmatpush.msra.mxu0 %v615
  %755 = vmatpush.msra.mxu0 %v611
  %756 = vmatpush.msra.mxu0 %v607
  %757 = vmatpush.msra.mxu0 %v603
  %758 = vmatpush.msra.mxu0 %v599
  %759 = vmatpush.msra.mxu0 %v595
  %760 = vmatpush.msra.mxu0 %v591
  %761 = vmatpush.msra.mxu0 %v587
  %762 = vmatpush.msra.mxu0 %v583
  %763 = vmatpush.msra.mxu0 %v579
  %764 = vmatpush.msra.mxu0 %v575
  %765 = vmatpush.msra.mxu0 %v571
  %766 = vmatpush.msra.mxu0 %v567
  %767 = vmatpush.msra.mxu0 %v563
  %768 = vmatpush.msra.mxu0 %v559
  %769 = vmatmul.f32.gmra.mxu0 %v548
  %v770 = vpop.f32.mrf.mxu0
  %v771 = vadd.f32 %v625, %v770
  %772 = vmatmul.f32.gmra.mxu0 %v549
  %v773 = vpop.f32.mrf.mxu0
  %v774 = vadd.f32 %v625, %v773
  %775 = vmatmul.f32.gmra.mxu0 %v550
  %v776 = vpop.f32.mrf.mxu0
  %v777 = vadd.f32 %v625, %v776
  %778 = vmatmul.f32.gmra.mxu0 %v551
  %v779 = vpop.f32.mrf.mxu0
  %v780 = vadd.f32 %v625, %v779
  %781 = vmatmul.f32.gmra.mxu0 %v552
  %v782 = vpop.f32.mrf.mxu0
  %v783 = vadd.f32 %v625, %v782
  %784 = vmatmul.f32.gmra.mxu0 %v553
  %v785 = vpop.f32.mrf.mxu0
  %v786 = vadd.f32 %v625, %v785
  %787 = vmatmul.f32.gmra.mxu0 %v554
  %v788 = vpop.f32.mrf.mxu0
  %v789 = vadd.f32 %v625, %v788
  %790 = vmatmul.f32.gmra.mxu0 %v555
  %v791 = vpop.f32.mrf.mxu0
  %v792 = vadd.f32 %v625, %v791
  %793 = vdwg.mxu0
  %794 = vst [vmem:[#allocation2] sm:$0xff] %v648
  %795 = vst [vmem:[#allocation2 + $0x8] sm:$0xff] %v689
  %796 = vst [vmem:[#allocation2 + $0x10] sm:$0xff] %v730
  %797 = vst [vmem:[#allocation2 + $0x18] sm:$0xff] %v771
  %798 = vst [vmem:[#allocation2 + $0x20] sm:$0xff] %v651
  %799 = vst [vmem:[#allocation2 + $0x28] sm:$0xff] %v692
  %800 = vst [vmem:[#allocation2 + $0x30] sm:$0xff] %v733
  %801 = vst [vmem:[#allocation2 + $0x38] sm:$0xff] %v774
  %802 = vst [vmem:[#allocation2 + $0x40] sm:$0xff] %v654
  %803 = vst [vmem:[#allocation2 + $0x48] sm:$0xff] %v695
  %804 = vst [vmem:[#allocation2 + $0x50] sm:$0xff] %v736
  %805 = vst [vmem:[#allocation2 + $0x58] sm:$0xff] %v777
  %806 = vst [vmem:[#allocation2 + $0x60] sm:$0xff] %v657
  %807 = vst [vmem:[#allocation2 + $0x68] sm:$0xff] %v698
  %808 = vst [vmem:[#allocation2 + $0x70] sm:$0xff] %v739
  %809 = vst [vmem:[#allocation2 + $0x78] sm:$0xff] %v780
  %810 = vst [vmem:[#allocation2 + $0x80] sm:$0xff] %v660
  %811 = vst [vmem:[#allocation2 + $0x88] sm:$0xff] %v701
  %812 = vst [vmem:[#allocation2 + $0x90] sm:$0xff] %v742
  %813 = vst [vmem:[#allocation2 + $0x98] sm:$0xff] %v783
  %814 = vst [vmem:[#allocation2 + $0xa0] sm:$0xff] %v663
  %815 = vst [vmem:[#allocation2 + $0xa8] sm:$0xff] %v704
  %816 = vst [vmem:[#allocation2 + $0xb0] sm:$0xff] %v745
  %817 = vst [vmem:[#allocation2 + $0xb8] sm:$0xff] %v786
  %818 = vst [vmem:[#allocation2 + $0xc0] sm:$0xff] %v666
  %819 = vst [vmem:[#allocation2 + $0xc8] sm:$0xff] %v707
  %820 = vst [vmem:[#allocation2 + $0xd0] sm:$0xff] %v748
  %821 = vst [vmem:[#allocation2 + $0xd8] sm:$0xff] %v789
  %822 = vst [vmem:[#allocation2 + $0xe0] sm:$0xff] %v669
  %823 = vst [vmem:[#allocation2 + $0xe8] sm:$0xff] %v710
  %824 = vst [vmem:[#allocation2 + $0xf0] sm:$0xff] %v751
  %825 = vst [vmem:[#allocation2 + $0xf8] sm:$0xff] %v792
  %s826 = scalar_lea.vmem %s1, 8
  %v827 = vld [vmem:[%s826] sm:$0xff]
  %s828 = scalar_lea.vmem %s2, 8
  %v829 = vld [vmem:[%s828] sm:$0xff]
  loop: start=0, step=1, limit=8
  $region45: #{char_nlm_forward.4} parent=0 // loop_pre_header
    _
  $region46: #{char_nlm_forward.4} parent=0 // loop_header
    %s831 = sphi 0, %s835
    %p832 = scmp.ge.s32.totalorder %s831, 8
    %v836 = vphi %v827, %v1058
    %v837 = vphi %v829, %v1056
  $region47: #{char_nlm_forward.4} parent=0 // loop_header_branch
    %834 = sbr.rel (%p832) target = $region51
  $region48: #{char_nlm_forward.4} parent=0 // loop_body
    %s838 = smul.u32 %s831, 8
    %s839 = sshra.s32 %s838, 3
    %s840 = sand.u32 %s838, 7
    %s841 = smul.u32 %s839, 4
    %s842 = smul.addr %s841, 8
    %s843 = scalar_lea.vmem [#allocation2], %s842
    %v844 = vld [vmem:[%s843] sm:$0xff]
    %v845 = vld [vmem:[%s843 + $0x8] sm:$0xff]
    %v846 = vld [vmem:[%s843 + $0x10] sm:$0xff]
    %v847 = vld [vmem:[%s843 + $0x18] sm:$0xff]
    %v848 = vld [vmem:[%s7] sm:$0xff]
    %v849 = vld [vmem:[%s7 + $0x8] sm:$0xff]
    %v850 = vld [vmem:[%s7 + $0x10] sm:$0xff]
    %v851 = vld [vmem:[%s7 + $0x18] sm:$0xff]
    %v852 = vld [vmem:[%s7 + $0x20] sm:$0xff]
    %v853 = vld [vmem:[%s7 + $0x28] sm:$0xff]
    %v854 = vld [vmem:[%s7 + $0x30] sm:$0xff]
    %v855 = vld [vmem:[%s7 + $0x38] sm:$0xff]
    %v856 = vld [vmem:[%s7 + $0x40] sm:$0xff]
    %v857 = vld [vmem:[%s7 + $0x48] sm:$0xff]
    %v858 = vld [vmem:[%s7 + $0x50] sm:$0xff]
    %v859 = vld [vmem:[%s7 + $0x58] sm:$0xff]
    %v860 = vld [vmem:[%s7 + $0x60] sm:$0xff]
    %v861 = vld [vmem:[%s7 + $0x68] sm:$0xff]
    %v862 = vld [vmem:[%s7 + $0x70] sm:$0xff]
    %v863 = vld [vmem:[%s7 + $0x78] sm:$0xff]
    %v864 = vld [vmem:[%s7 + $0x80] sm:$0xff]
    %v865 = vld [vmem:[%s7 + $0x88] sm:$0xff]
    %v866 = vld [vmem:[%s7 + $0x90] sm:$0xff]
    %v867 = vld [vmem:[%s7 + $0x98] sm:$0xff]
    %v868 = vld [vmem:[%s7 + $0xa0] sm:$0xff]
    %v869 = vld [vmem:[%s7 + $0xa8] sm:$0xff]
    %v870 = vld [vmem:[%s7 + $0xb0] sm:$0xff]
    %v871 = vld [vmem:[%s7 + $0xb8] sm:$0xff]
    %v872 = vld [vmem:[%s7 + $0xc0] sm:$0xff]
    %v873 = vld [vmem:[%s7 + $0xc8] sm:$0xff]
    %v874 = vld [vmem:[%s7 + $0xd0] sm:$0xff]
    %v875 = vld [vmem:[%s7 + $0xd8] sm:$0xff]
    %v876 = vld [vmem:[%s7 + $0xe0] sm:$0xff]
    %v877 = vld [vmem:[%s7 + $0xe8] sm:$0xff]
    %v878 = vld [vmem:[%s7 + $0xf0] sm:$0xff]
    %v879 = vld [vmem:[%s7 + $0xf8] sm:$0xff]
    %v880 = vld [vmem:[%s7 + $0x100] sm:$0xff]
    %v881 = vld [vmem:[%s7 + $0x108] sm:$0xff]
    %v882 = vld [vmem:[%s7 + $0x110] sm:$0xff]
    %v883 = vld [vmem:[%s7 + $0x118] sm:$0xff]
    %v884 = vld [vmem:[%s7 + $0x120] sm:$0xff]
    %v885 = vld [vmem:[%s7 + $0x128] sm:$0xff]
    %v886 = vld [vmem:[%s7 + $0x130] sm:$0xff]
    %v887 = vld [vmem:[%s7 + $0x138] sm:$0xff]
    %v888 = vld [vmem:[%s7 + $0x140] sm:$0xff]
    %v889 = vld [vmem:[%s7 + $0x148] sm:$0xff]
    %v890 = vld [vmem:[%s7 + $0x150] sm:$0xff]
    %v891 = vld [vmem:[%s7 + $0x158] sm:$0xff]
    %v892 = vld [vmem:[%s7 + $0x160] sm:$0xff]
    %v893 = vld [vmem:[%s7 + $0x168] sm:$0xff]
    %v894 = vld [vmem:[%s7 + $0x170] sm:$0xff]
    %v895 = vld [vmem:[%s7 + $0x178] sm:$0xff]
    %v896 = vld [vmem:[%s7 + $0x180] sm:$0xff]
    %v897 = vld [vmem:[%s7 + $0x188] sm:$0xff]
    %v898 = vld [vmem:[%s7 + $0x190] sm:$0xff]
    %v899 = vld [vmem:[%s7 + $0x198] sm:$0xff]
    %v900 = vld [vmem:[%s7 + $0x1a0] sm:$0xff]
    %v901 = vld [vmem:[%s7 + $0x1a8] sm:$0xff]
    %v902 = vld [vmem:[%s7 + $0x1b0] sm:$0xff]
    %v903 = vld [vmem:[%s7 + $0x1b8] sm:$0xff]
    %v904 = vld [vmem:[%s7 + $0x1c0] sm:$0xff]
    %v905 = vld [vmem:[%s7 + $0x1c8] sm:$0xff]
    %v906 = vld [vmem:[%s7 + $0x1d0] sm:$0xff]
    %v907 = vld [vmem:[%s7 + $0x1d8] sm:$0xff]
    %v908 = vld [vmem:[%s7 + $0x1e0] sm:$0xff]
    %v909 = vld [vmem:[%s7 + $0x1e8] sm:$0xff]
    %v910 = vld [vmem:[%s7 + $0x1f0] sm:$0xff]
    %v911 = vld [vmem:[%s7 + $0x1f8] sm:$0xff]
    %912 = vmatpush.msra.mxu0 %v908
    %913 = vmatpush.msra.mxu0 %v904
    %914 = vmatpush.msra.mxu0 %v900
    %915 = vmatpush.msra.mxu0 %v896
    %916 = vmatpush.msra.mxu0 %v892
    %917 = vmatpush.msra.mxu0 %v888
    %918 = vmatpush.msra.mxu0 %v884
    %919 = vmatpush.msra.mxu0 %v880
    %920 = vmatpush.msra.mxu0 %v876
    %921 = vmatpush.msra.mxu0 %v872
    %922 = vmatpush.msra.mxu0 %v868
    %923 = vmatpush.msra.mxu0 %v864
    %924 = vmatpush.msra.mxu0 %v860
    %925 = vmatpush.msra.mxu0 %v856
    %926 = vmatpush.msra.mxu0 %v852
    %927 = vmatpush.msra.mxu0 %v848
    %928 = vmatmul.f32.gmra.mxu0 %v836
    %v929 = vpop.f32.mrf.mxu0
    %v930 = vadd.f32 0.0, %v929
    %931 = vdwg.mxu0
    %932 = vmatpush.msra.mxu0 %v909
    %933 = vmatpush.msra.mxu0 %v905
    %934 = vmatpush.msra.mxu0 %v901
    %935 = vmatpush.msra.mxu0 %v897
    %936 = vmatpush.msra.mxu0 %v893
    %937 = vmatpush.msra.mxu0 %v889
    %938 = vmatpush.msra.mxu0 %v885
    %939 = vmatpush.msra.mxu0 %v881
    %940 = vmatpush.msra.mxu0 %v877
    %941 = vmatpush.msra.mxu0 %v873
    %942 = vmatpush.msra.mxu0 %v869
    %943 = vmatpush.msra.mxu0 %v865
    %944 = vmatpush.msra.mxu0 %v861
    %945 = vmatpush.msra.mxu0 %v857
    %946 = vmatpush.msra.mxu0 %v853
    %947 = vmatpush.msra.mxu0 %v849
    %948 = vmatmul.f32.gmra.mxu0 %v836
    %v949 = vpop.f32.mrf.mxu0
    %v950 = vadd.f32 0.0, %v949
    %951 = vdwg.mxu0
    %952 = vmatpush.msra.mxu0 %v910
    %953 = vmatpush.msra.mxu0 %v906
    %954 = vmatpush.msra.mxu0 %v902
    %955 = vmatpush.msra.mxu0 %v898
    %956 = vmatpush.msra.mxu0 %v894
    %957 = vmatpush.msra.mxu0 %v890
    %958 = vmatpush.msra.mxu0 %v886
    %959 = vmatpush.msra.mxu0 %v882
    %960 = vmatpush.msra.mxu0 %v878
    %961 = vmatpush.msra.mxu0 %v874
    %962 = vmatpush.msra.mxu0 %v870
    %963 = vmatpush.msra.mxu0 %v866
    %964 = vmatpush.msra.mxu0 %v862
    %965 = vmatpush.msra.mxu0 %v858
    %966 = vmatpush.msra.mxu0 %v854
    %967 = vmatpush.msra.mxu0 %v850
    %968 = vmatmul.f32.gmra.mxu0 %v836
    %v969 = vpop.f32.mrf.mxu0
    %v970 = vadd.f32 0.0, %v969
    %971 = vdwg.mxu0
    %972 = vmatpush.msra.mxu0 %v911
    %973 = vmatpush.msra.mxu0 %v907
    %974 = vmatpush.msra.mxu0 %v903
    %975 = vmatpush.msra.mxu0 %v899
    %976 = vmatpush.msra.mxu0 %v895
    %977 = vmatpush.msra.mxu0 %v891
    %978 = vmatpush.msra.mxu0 %v887
    %979 = vmatpush.msra.mxu0 %v883
    %980 = vmatpush.msra.mxu0 %v879
    %981 = vmatpush.msra.mxu0 %v875
    %982 = vmatpush.msra.mxu0 %v871
    %983 = vmatpush.msra.mxu0 %v867
    %984 = vmatpush.msra.mxu0 %v863
    %985 = vmatpush.msra.mxu0 %v859
    %986 = vmatpush.msra.mxu0 %v855
    %987 = vmatpush.msra.mxu0 %v851
    %988 = vmatmul.f32.gmra.mxu0 %v836
    %v989 = vpop.f32.mrf.mxu0
    %v990 = vadd.f32 0.0, %v989
    %991 = vdwg.mxu0
    %v992 = vadd.f32 %v844, %v930
    %v993 = vadd.f32 %v845, %v950
    %v994 = vadd.f32 %v846, %v970
    %v995 = vadd.f32 %v847, %v990
    %v996 = vxor.u32 %v992, 2147483648
    %v997 = vmul.f32 %v996, 1.442695
    %v998 = vpow.pop %v997
    %v999 = vadd.f32 %v998, 1.0
    %v1000 = vrcp.pop %v999
    %v1001 = vmul.f32 %v999, %v1000
    %v1002 = vsub.f32 1.0, %v1001
    %v1003 = vmul.f32 %v1000, %v1002
    %v1004 = vadd.f32 %v1000, %v1003
    %vm1005 = vweird.f32 %v999
    %vm1006 = vweird.f32 %v1000
    %vm1007 = vmor %vm1005, %vm1006
    %v1008 = vsel %vm1007, %v1000, %v1004
    %v1009 = vand.u32 2147483647, %v999
    %vm1010 = vcmp.eq.f32.partialorder %v1009, 8.507059e+37
    %v1011 = vand.u32 %v999, 2147483648
    %v1012 = vor.u32 1.1754944e-38, %v1011
    %v1013 = vsel %vm1010, %v1012, %v1008
    %v1014 = vmul.f32 1.0, %v1013
    %v1015 = vxor.u32 %v993, 2147483648
    %v1016 = vmul.f32 %v1015, 1.442695
    %v1017 = vpow.pop %v1016
    %v1018 = vadd.f32 %v1017, 1.0
    %v1019 = vrcp.pop %v1018
    %v1020 = vmul.f32 %v1018, %v1019
    %v1021 = vsub.f32 1.0, %v1020
    %v1022 = vmul.f32 %v1019, %v1021
    %v1023 = vadd.f32 %v1019, %v1022
    %vm1024 = vweird.f32 %v1018
    %vm1025 = vweird.f32 %v1019
    %vm1026 = vmor %vm1024, %vm1025
    %v1027 = vsel %vm1026, %v1019, %v1023
    %v1028 = vand.u32 2147483647, %v1018
    %vm1029 = vcmp.eq.f32.partialorder %v1028, 8.507059e+37
    %v1030 = vand.u32 %v1018, 2147483648
    %v1031 = vor.u32 1.1754944e-38, %v1030
    %v1032 = vsel %vm1029, %v1031, %v1027
    %v1033 = vmul.f32 1.0, %v1032
    %v1034 = vtanh.pop %v994
    %v1035 = vxor.u32 %v995, 2147483648
    %v1036 = vmul.f32 %v1035, 1.442695
    %v1037 = vpow.pop %v1036
    %v1038 = vadd.f32 %v1037, 1.0
    %v1039 = vrcp.pop %v1038
    %v1040 = vmul.f32 %v1038, %v1039
    %v1041 = vsub.f32 1.0, %v1040
    %v1042 = vmul.f32 %v1039, %v1041
    %v1043 = vadd.f32 %v1039, %v1042
    %vm1044 = vweird.f32 %v1038
    %vm1045 = vweird.f32 %v1039
    %vm1046 = vmor %vm1044, %vm1045
    %v1047 = vsel %vm1046, %v1039, %v1043
    %v1048 = vand.u32 2147483647, %v1038
    %vm1049 = vcmp.eq.f32.partialorder %v1048, 8.507059e+37
    %v1050 = vand.u32 %v1038, 2147483648
    %v1051 = vor.u32 1.1754944e-38, %v1050
    %v1052 = vsel %vm1049, %v1051, %v1047
    %v1053 = vmul.f32 1.0, %v1052
    %v1054 = vmul.f32 %v1033, %v837
    %v1055 = vmul.f32 %v1014, %v1034
    %v1056 = vadd.f32 %v1054, %v1055
    %v1057 = vtanh.pop %v1056
    %v1058 = vmul.f32 %v1053, %v1057
    %s1059 = scalar_lea.vmem %s9, %s838
    %1060 = vst [vmem:[%s1059] sm:$0xff] %v1058
  $region49: #{char_nlm_forward.4} parent=0 // loop_footer
    %s835 = sadd.s32 1, %s831
  $region50: #{char_nlm_forward.4} parent=0 // loop_footer_branch
    %830 = sbr.rel target = $region46
  $region51: #{char_nlm_forward.4} parent=0 // loop_exit
    _
  %s1061 = scalar_lea.vmem %s10, 8
  %1062 = vst [vmem:[%s1061] sm:$0xff] %v836
  %s1063 = scalar_lea.vmem %s11, 8
  %1064 = vst [vmem:[%s1063] sm:$0xff] %v837
  // Predicated region
  $region52: #{char_nlm_forward.4} parent=0 // pred_check
    _
  $region53: #{char_nlm_forward.4} parent=0 // pred_check_branch
    %1066 = sbr.rel (0) target = $region55
  $region54: #{char_nlm_forward.4} parent=0 // pred_region
    _
  $region55: #{char_nlm_forward.4} parent=0 // pred_fallthru
    _
  // Predicated region
  $region56: #{char_nlm_forward.4} parent=0 // pred_check
    _
  $region57: #{char_nlm_forward.4} parent=0 // pred_check_branch
    %1068 = sbr.rel (0) target = $region59
  $region58: #{char_nlm_forward.4} parent=0 // pred_region
    _
  $region59: #{char_nlm_forward.4} parent=0 // pred_fallthru
    _
  // Predicated region
  $region60: #{char_nlm_forward.4} parent=0 // pred_check
    _
  $region61: #{char_nlm_forward.4} parent=0 // pred_check_branch
    %1070 = sbr.rel (0) target = $region63
  $region62: #{char_nlm_forward.4} parent=0 // pred_region
    _
  $region63: #{char_nlm_forward.4} parent=0 // pred_fallthru
    _
  // Predicated region
  $region64: #{char_nlm_forward.4} parent=0 // pred_check
    _
  $region65: #{char_nlm_forward.4} parent=0 // pred_check_branch
    %1072 = sbr.rel (0) target = $region67
  $region66: #{char_nlm_forward.4} parent=0 // pred_region
    _
  $region67: #{char_nlm_forward.4} parent=0 // pred_fallthru
    _
  // Predicated region
  $region68: #{char_nlm_forward.4} parent=0 // pred_check
    _
  $region69: #{char_nlm_forward.4} parent=0 // pred_check_branch
    %1074 = sbr.rel (0) target = $region71
  $region70: #{char_nlm_forward.4} parent=0 // pred_region
    _
  $region71: #{char_nlm_forward.4} parent=0 // pred_fallthru
    _
  // Predicated region
  $region72: #{char_nlm_forward.4} parent=0 // pred_check
    _
  $region73: #{char_nlm_forward.4} parent=0 // pred_check_branch
    %1076 = sbr.rel (0) target = $region75
  $region74: #{char_nlm_forward.4} parent=0 // pred_region
    _
  $region75: #{char_nlm_forward.4} parent=0 // pred_fallthru
    _

</llo_original>
